<compile_context>
chip_gen: v6e
topology: v6e:2x2x1
jax: 0.10.0
libtpu: 0.0.40
codegen_flags: <defaults>
</compile_context>

<pallas_src>
import jax
import jax.numpy as jnp
from jax.experimental import pallas as pl
from jax.experimental.pallas import tpu as pltpu

N_VOCAB = 28
N_EMB = 128
N_HIDDEN = 128
N_LAYERS = 3
VP = 128          # lane-padded vocab (28 -> 128)
SUBLANE = 8       # f32 sublane tile


# ------------------------------ fused kernel ---------------------------------
def _make_fused_kernel(T, Bp, H, E, Vp, n_layers):
    TB = T * Bp

    def kernel(tok_ref, emb_ref, wih_ref, whh_ref, b_ref,
               fcw_ref, fcb_ref, outw_ref, outb_ref,
               o_ref, hist_ref, gates_ref):
        """Fused forward; grid axis 0 iterates LSTM layers sequentially.

        tok_ref:  (T*Bp, 1)  i32  time-major tokens, batch padded to Bp
        emb_ref:  (Vp, E)    bf16 lane-padded embedding table
        wih_ref:  (E, 4H)    bf16 this layer's W_ih^T (gate cols [i,f,o,g])
        whh_ref:  (H, 4H)    bf16 this layer's W_hh^T (gate cols [i,f,o,g])
        b_ref:    (1, 4H)    f32  b_ih + b_hh for this layer
        fcw_ref:  (H, E) bf16, fcb_ref: (1, E) f32
        outw_ref: (E, Vp) bf16, outb_ref: (1, Vp) f32  (zero-padded V -> Vp)
        o_ref:    (T*Bp, Vp) f32  lane-dense logits (written on last layer only)
        hist_ref: (T*Bp, H)  f32  scratch: layer activations (VMEM-resident)
        gates_ref:(T*Bp, 4H) f32  scratch: hoisted input projection
        """
        l = pl.program_id(0)

        # Layer 0 only: fused embedding lookup as a one-hot MXU matmul.
        @pl.when(l == 0)
        def _():
            tok = tok_ref[...]                                       # (TB, 1) i32
            lane = jax.lax.broadcasted_iota(jnp.int32, (TB, Vp), 1)
            onehot = (lane == tok).astype(jnp.bfloat16)              # (TB, Vp)
            hist_ref[...] = jnp.dot(onehot, emb_ref[...],
                                    preferred_element_type=jnp.float32)

        # Hoisted input projection for the whole sequence: one big MXU matmul with
        # M = T*Bp instead of T tiny per-step pushes; bias folded in here.
        gates_ref[...] = (
            jnp.dot(hist_ref[...].astype(jnp.bfloat16), wih_ref[...],
                    preferred_element_type=jnp.float32)
            + b_ref[...])

        # Loop-invariant recurrent weight: load once per layer (bf16, half traffic).
        whh = whh_ref[...]
        h = jnp.zeros((Bp, H), jnp.float32)
        c = jnp.zeros((Bp, H), jnp.float32)
        # Statically unrolled recurrence (T is small/static): only h @ W_hh is serial.
        for t in range(T):
            g = gates_ref[t * Bp:(t + 1) * Bp, :] + jnp.dot(
                h.astype(jnp.bfloat16), whh, preferred_element_type=jnp.float32)
            # Gate cols pre-permuted to [i, f, o | g]: one wide sigmoid, one tanh.
            sig = jax.nn.sigmoid(g[:, 0:3 * H])        # (Bp, 3H): [i | f | o]
            g_g = jnp.tanh(g[:, 3 * H:4 * H])          # (Bp, H)
            c = sig[:, H:2 * H] * c + sig[:, 0:H] * g_g
            h = sig[:, 2 * H:3 * H] * jnp.tanh(c)
            hist_ref[t * Bp:(t + 1) * Bp, :] = h        # dense (8,128) store
        # TODO(synk): nn.LSTM inter-layer dropout (p=0.1) skipped (eval-mode identity).

        # Last layer only: fc -> relu -> output head, lane-dense (Vp = 128) output.
        @pl.when(l == n_layers - 1)
        def _():
            fc_h = jnp.maximum(
                jnp.dot(hist_ref[...].astype(jnp.bfloat16), fcw_ref[...],
                        preferred_element_type=jnp.float32)
                + fcb_ref[...], 0.0)
            o_ref[...] = (
                jnp.dot(fc_h.astype(jnp.bfloat16), outw_ref[...],
                        preferred_element_type=jnp.float32)
                + outb_ref[...])

    return kernel


def _fused_forward_call(tok_flat, kp, T, Bp):
    """tok_flat: (T*Bp, 1) int32.  Returns (T*Bp, VP) f32 logits (lane-padded)."""
    H, E, L, Vp = N_HIDDEN, N_EMB, N_LAYERS, VP
    TB = T * Bp
    kernel = _make_fused_kernel(T, Bp, H, E, Vp, L)
    return pl.pallas_call(
        kernel,
        out_shape=jax.ShapeDtypeStruct((TB, Vp), jnp.float32),
        grid_spec=pltpu.PrefetchScalarGridSpec(
            num_scalar_prefetch=0,
            grid=(L,),
            in_specs=[
                # constant block index => DMA'd once, stays resident across layers
                pl.BlockSpec((TB, 1), lambda l: (0, 0)),            # tokens
                pl.BlockSpec((Vp, E), lambda l: (0, 0)),            # embedding table
                # per-layer weight blocks => double-buffered prefetch of layer l+1
                pl.BlockSpec((None, E, 4 * H), lambda l: (l, 0, 0)),
                pl.BlockSpec((None, H, 4 * H), lambda l: (l, 0, 0)),
                pl.BlockSpec((None, 1, 4 * H), lambda l: (l, 0, 0)),
                pl.BlockSpec((H, E), lambda l: (0, 0)),
                pl.BlockSpec((1, E), lambda l: (0, 0)),
                pl.BlockSpec((E, Vp), lambda l: (0, 0)),
                pl.BlockSpec((1, Vp), lambda l: (0, 0)),
            ],
            out_specs=pl.BlockSpec((TB, Vp), lambda l: (0, 0)),
            scratch_shapes=[
                pltpu.VMEM((TB, H), jnp.float32),      # layer activation history
                pltpu.VMEM((TB, 4 * H), jnp.float32),  # hoisted input projection
            ],
        ),
        compiler_params=pltpu.CompilerParams(
            dimension_semantics=("arbitrary",)),
    )(tok_flat, kp["emb_pad"], kp["wih"], kp["whh"], kp["bias"],
      kp["fc_w_t"], kp["fc_b"], kp["out_w_t"], kp["out_b"])


# --------------------------------- wrapper ------------------------------------
def lstm_op_forward(kparams, tokens):
    """tokens: (B, T) int32.  Returns logits (B, T, N_VOCAB) f32."""
    B, T = tokens.shape
    Bp = ((B + SUBLANE - 1) // SUBLANE) * SUBLANE
    # Only tiny int32 token prep remains outside the kernel (a few hundred bytes);
    # the embedding gather / transpose / pad / reshape of floats is fused in-kernel.
    tok_tm = jnp.pad(tokens.T, ((0, 0), (0, Bp - B)))          # (T, Bp) time-major
    tok_flat = tok_tm.reshape(T * Bp, 1).astype(jnp.int32)
    logits = _fused_forward_call(tok_flat, kparams, T, Bp)     # (T*Bp, VP)
    logits = logits.reshape(T, Bp, VP)[:, :B, :N_VOCAB]        # strip padding
    return jnp.transpose(logits, (1, 0, 2))                    # (B, T, V)


# ------------------------------ parameter prep --------------------------------
def prepare_params(params):
    """One-time layout prep (NOT per-forward): transpose weights, combine biases,
    permute gate columns [i,f,g,o] -> [i,f,o,g], stack layers, cast matmul weights
    to bf16, pad embedding table / head output to lane-dense 128."""
    assert N_EMB == N_HIDDEN, "layer stacking assumes Din == H for all layers"
    H = N_HIDDEN

    def reorder_cols(w):   # (din_or_1, 4H) cols [i|f|g|o] -> [i|f|o|g]
        return jnp.concatenate(
            [w[:, 0:H], w[:, H:2 * H], w[:, 3 * H:4 * H], w[:, 2 * H:3 * H]], axis=1)

    wih = jnp.stack([reorder_cols(jnp.transpose(p["w_ih"]))
                     for p in params["lstm"]]).astype(jnp.bfloat16)     # (L, E, 4H)
    whh = jnp.stack([reorder_cols(jnp.transpose(p["w_hh"]))
                     for p in params["lstm"]]).astype(jnp.bfloat16)     # (L, H, 4H)
    bias = jnp.stack([reorder_cols((p["b_ih"] + p["b_hh"]).reshape(1, 4 * H))
                      for p in params["lstm"]])                          # (L, 1, 4H) f32
    emb_pad = jnp.pad(params["embedding"],
                      ((0, VP - N_VOCAB), (0, 0))).astype(jnp.bfloat16)  # (VP, E)
    fc_w_t = jnp.transpose(params["fc_w"]).astype(jnp.bfloat16)          # (H, E)
    fc_b = params["fc_b"].reshape(1, N_EMB)
    out_w_t = jnp.pad(jnp.transpose(params["out_w"]),
                      ((0, 0), (0, VP - N_VOCAB))).astype(jnp.bfloat16)  # (E, VP)
    out_b = jnp.pad(params["out_b"], (0, VP - N_VOCAB)).reshape(1, VP)   # (1, VP)
    return {
        "emb_pad": emb_pad,
        "wih": wih, "whh": whh, "bias": bias,
        "fc_w_t": fc_w_t, "fc_b": fc_b,
        "out_w_t": out_w_t, "out_b": out_b,
    }


# ------------------------------ deterministic init ----------------------------
def _uniform(key, shape, scale):
    return jax.random.uniform(key, shape, jnp.float32, -scale, scale)


def init_params(key):
    keys = jax.random.split(key, 4 + 4 * N_LAYERS + 4)
    ki = iter(keys)
    params = {}
    params["embedding"] = jax.random.normal(next(ki), (N_VOCAB, N_EMB), jnp.float32)
    k = 1.0 / jnp.sqrt(N_HIDDEN)
    lstm = []
    for l in range(N_LAYERS):
        din = N_EMB if l == 0 else N_HIDDEN
        lstm.append({
            "w_ih": _uniform(next(ki), (4 * N_HIDDEN, din), k),
            "w_hh": _uniform(next(ki), (4 * N_HIDDEN, N_HIDDEN), k),
            "b_ih": _uniform(next(ki), (4 * N_HIDDEN,), k),
            "b_hh": _uniform(next(ki), (4 * N_HIDDEN,), k),
        })
    params["lstm"] = lstm
    kfc = 1.0 / jnp.sqrt(N_HIDDEN)
    params["fc_w"] = _uniform(next(ki), (N_EMB, N_HIDDEN), kfc)
    params["fc_b"] = _uniform(next(ki), (N_EMB,), kfc)
    ko = 1.0 / jnp.sqrt(N_EMB)
    params["out_w"] = _uniform(next(ki), (N_VOCAB, N_EMB), ko)
    params["out_b"] = _uniform(next(ki), (N_VOCAB,), ko)
    return params


if __name__ == "__main__":
    root = jax.random.PRNGKey(0)
    k_params, k_tokens = jax.random.split(root)
    params = init_params(k_params)
    kparams = prepare_params(params)   # one-time layout prep

    B, T = 2, 8
    tokens = jax.random.randint(k_tokens, (B, T), 0, N_VOCAB, dtype=jnp.int32)

    fwd = jax.jit(lstm_op_forward)
    out = jax.block_until_ready(fwd(kparams, tokens))
    assert out.shape == (B, T, N_VOCAB), out.shape
    assert out.dtype == jnp.float32
    assert bool(jnp.all(jnp.isfinite(out)))
    print("KERNEL_OK")
</pallas_src>

<mosaic_0001>
module attributes {stable_mosaic.version = 11 : i64} {
  func.func @kernel(%arg0: i32, %arg1: memref<64x1xi32, #tpu.memory_space<vmem>>, %arg2: memref<128x128xbf16, #tpu.memory_space<vmem>>, %arg3: memref<1x128x512xbf16, #tpu.memory_space<vmem>>, %arg4: memref<1x128x512xbf16, #tpu.memory_space<vmem>>, %arg5: memref<1x1x512xf32, #tpu.memory_space<vmem>>, %arg6: memref<128x128xbf16, #tpu.memory_space<vmem>>, %arg7: memref<1x128xf32, #tpu.memory_space<vmem>>, %arg8: memref<128x128xbf16, #tpu.memory_space<vmem>>, %arg9: memref<1x128xf32, #tpu.memory_space<vmem>>, %arg10: memref<64x128xf32, #tpu.memory_space<vmem>>, %arg11: memref<64x128xf32, #tpu.memory_space<vmem>>, %arg12: memref<64x512xf32, #tpu.memory_space<vmem>>) attributes {dimension_semantics = [#tpu.dimension_semantics<arbitrary>], iteration_bounds = array<i64: 3>, scalar_prefetch = 0 : i64, scratch_operands = 2 : i64, tpu.core_type = #tpu.core_type<tc>, window_params = [{pipeline_mode = #tpu.pipeline_mode<synchronous>, transform_indices = @transform_0, window_bounds = array<i64: 64, 1>}, {pipeline_mode = #tpu.pipeline_mode<synchronous>, transform_indices = @transform_1, window_bounds = array<i64: 128, 128>}, {transform_indices = @transform_2, window_bounds = array<i64: 1, 128, 512>}, {transform_indices = @transform_3, window_bounds = array<i64: 1, 128, 512>}, {transform_indices = @transform_4, window_bounds = array<i64: 1, 1, 512>}, {pipeline_mode = #tpu.pipeline_mode<synchronous>, transform_indices = @transform_5, window_bounds = array<i64: 128, 128>}, {pipeline_mode = #tpu.pipeline_mode<synchronous>, transform_indices = @transform_6, window_bounds = array<i64: 1, 128>}, {pipeline_mode = #tpu.pipeline_mode<synchronous>, transform_indices = @transform_7, window_bounds = array<i64: 128, 128>}, {pipeline_mode = #tpu.pipeline_mode<synchronous>, transform_indices = @transform_8, window_bounds = array<i64: 1, 128>}, {pipeline_mode = #tpu.pipeline_mode<synchronous>, transform_indices = @transform_9, window_bounds = array<i64: 64, 128>}]} {
    %c0_i32 = arith.constant 0 : i32
    %0 = arith.cmpi eq, %arg0, %c0_i32 : i32
    %1 = arith.extui %0 : i1 to i32
    %c0_i32_0 = arith.constant 0 : i32
    %2 = arith.cmpi ne, %1, %c0_i32_0 : i32
    scf.if %2 {
      %c0_57 = arith.constant 0 : index
      %c0_58 = arith.constant 0 : index
      %188 = vector.load %arg1[%c0_57, %c0_58] : memref<64x1xi32, #tpu.memory_space<vmem>>, vector<64x1xi32>
      %189 = tpu.iota {dimensions = array<i32: 1>} : vector<64x128xi32>
      %190 = vector.broadcast %188 : vector<64x1xi32> to vector<64x128xi32>
      %191 = arith.cmpi eq, %189, %190 : vector<64x128xi32>
      %192 = arith.extui %191 : vector<64x128xi1> to vector<64x128xi32>
      %193 = arith.sitofp %192 : vector<64x128xi32> to vector<64x128xf32>
      %194 = arith.truncf %193 : vector<64x128xf32> to vector<64x128xbf16>
      %c0_59 = arith.constant 0 : index
      %c0_60 = arith.constant 0 : index
      %195 = vector.load %arg2[%c0_59, %c0_60] : memref<128x128xbf16, #tpu.memory_space<vmem>>, vector<128x128xbf16>
      %cst_61 = arith.constant dense<0.000000e+00> : vector<64x128xf32>
      %196 = tpu.matmul %194, %195, %cst_61 {dimension_numbers = #tpu.dot_dimension_numbers<[1], [0], [0], [1], [0, 0, 1, 1], [], []>} : vector<64x128xbf16>, vector<128x128xbf16>, vector<64x128xf32> -> vector<64x128xf32>
      %c0_62 = arith.constant 0 : index
      %c0_63 = arith.constant 0 : index
      %197 = vector.load %arg11[%c0_62, %c0_63] : memref<64x128xf32, #tpu.memory_space<vmem>>, vector<64x128xf32>
      tpu.vector_store %arg11[%c0_62, %c0_63], %196 {strides = array<i32>} : memref<64x128xf32, #tpu.memory_space<vmem>>, vector<64x128xf32>,
    } else {
    }
    %c0 = arith.constant 0 : index
    %c0_1 = arith.constant 0 : index
    %3 = vector.load %arg11[%c0, %c0_1] : memref<64x128xf32, #tpu.memory_space<vmem>>, vector<64x128xf32>
    %4 = arith.truncf %3 : vector<64x128xf32> to vector<64x128xbf16>
    %c0_2 = arith.constant 0 : index
    %c0_3 = arith.constant 0 : index
    %c0_4 = arith.constant 0 : index
    %5 = vector.load %arg3[%c0_2, %c0_3, %c0_4] : memref<1x128x512xbf16, #tpu.memory_space<vmem>>, vector<1x128x512xbf16>
    %6 = vector.shape_cast %5 : vector<1x128x512xbf16> to vector<128x512xbf16>
    %cst = arith.constant dense<0.000000e+00> : vector<64x512xf32>
    %7 = tpu.matmul %4, %6, %cst {dimension_numbers = #tpu.dot_dimension_numbers<[1], [0], [0], [1], [0, 0, 1, 1], [], []>} : vector<64x128xbf16>, vector<128x512xbf16>, vector<64x512xf32> -> vector<64x512xf32>
    %c0_5 = arith.constant 0 : index
    %c0_6 = arith.constant 0 : index
    %c0_7 = arith.constant 0 : index
    %8 = vector.load %arg5[%c0_5, %c0_6, %c0_7] : memref<1x1x512xf32, #tpu.memory_space<vmem>>, vector<1x1x512xf32>
    %9 = vector.shape_cast %8 : vector<1x1x512xf32> to vector<1x512xf32>
    %10 = vector.broadcast %9 : vector<1x512xf32> to vector<64x512xf32>
    %11 = arith.addf %7, %10 : vector<64x512xf32>
    %c0_8 = arith.constant 0 : index
    %c0_9 = arith.constant 0 : index
    %12 = vector.load %arg12[%c0_8, %c0_9] : memref<64x512xf32, #tpu.memory_space<vmem>>, vector<64x512xf32>
    tpu.vector_store %arg12[%c0_8, %c0_9], %11 {strides = array<i32>} : memref<64x512xf32, #tpu.memory_space<vmem>>, vector<64x512xf32>,
    %c0_10 = arith.constant 0 : index
    %c0_11 = arith.constant 0 : index
    %c0_12 = arith.constant 0 : index
    %13 = vector.load %arg4[%c0_10, %c0_11, %c0_12] : memref<1x128x512xbf16, #tpu.memory_space<vmem>>, vector<1x128x512xbf16>
    %14 = vector.shape_cast %13 : vector<1x128x512xbf16> to vector<128x512xbf16>
    %cst_13 = arith.constant 0.000000e+00 : f32
    %15 = vector.broadcast %cst_13 : f32 to vector<8x128xf32>
    %cst_14 = arith.constant 0.000000e+00 : f32
    %16 = vector.broadcast %cst_14 : f32 to vector<8x128xf32>
    %c0_15 = arith.constant 0 : index
    %c0_16 = arith.constant 0 : index
    %17 = vector.load %arg12[%c0_15, %c0_16] : memref<64x512xf32, #tpu.memory_space<vmem>>, vector<8x512xf32>
    %18 = arith.truncf %15 : vector<8x128xf32> to vector<8x128xbf16>
    %cst_17 = arith.constant dense<0.000000e+00> : vector<8x512xf32>
    %19 = tpu.matmul %18, %14, %cst_17 {dimension_numbers = #tpu.dot_dimension_numbers<[1], [0], [0], [1], [0, 0, 1, 1], [], []>} : vector<8x128xbf16>, vector<128x512xbf16>, vector<8x512xf32> -> vector<8x512xf32>
    %20 = arith.addf %17, %19 : vector<8x512xf32>
    %21 = vector.extract_strided_slice %20 {offsets = [0, 0], sizes = [8, 384], strides = [1, 1]} : vector<8x512xf32> to vector<8x384xf32>
    %22 = arith.negf %21 : vector<8x384xf32>
    %23 = math.exp %22 : vector<8x384xf32>
    %cst_18 = arith.constant 1.000000e+00 : f32
    %24 = vector.broadcast %cst_18 : f32 to vector<8x384xf32>
    %25 = arith.addf %24, %23 : vector<8x384xf32>
    %26 = arith.divf %24, %25 : vector<8x384xf32>
    %27 = vector.extract_strided_slice %20 {offsets = [0, 384], sizes = [8, 128], strides = [1, 1]} : vector<8x512xf32> to vector<8x128xf32>
    %28 = math.tanh %27 : vector<8x128xf32>
    %29 = vector.extract_strided_slice %26 {offsets = [0, 128], sizes = [8, 128], strides = [1, 1]} : vector<8x384xf32> to vector<8x128xf32>
    %30 = arith.mulf %29, %16 : vector<8x128xf32>
    %31 = vector.extract_strided_slice %26 {offsets = [0, 0], sizes = [8, 128], strides = [1, 1]} : vector<8x384xf32> to vector<8x128xf32>
    %32 = arith.mulf %31, %28 : vector<8x128xf32>
    %33 = arith.addf %30, %32 : vector<8x128xf32>
    %34 = vector.extract_strided_slice %26 {offsets = [0, 256], sizes = [8, 128], strides = [1, 1]} : vector<8x384xf32> to vector<8x128xf32>
    %35 = math.tanh %33 : vector<8x128xf32>
    %36 = arith.mulf %34, %35 : vector<8x128xf32>
    %c0_19 = arith.constant 0 : index
    %c0_20 = arith.constant 0 : index
    %37 = vector.load %arg11[%c0_19, %c0_20] : memref<64x128xf32, #tpu.memory_space<vmem>>, vector<8x128xf32>
    tpu.vector_store %arg11[%c0_19, %c0_20], %36 {strides = array<i32>} : memref<64x128xf32, #tpu.memory_space<vmem>>, vector<8x128xf32>,
    %c8 = arith.constant 8 : index
    %c0_21 = arith.constant 0 : index
    %38 = vector.load %arg12[%c8, %c0_21] : memref<64x512xf32, #tpu.memory_space<vmem>>, vector<8x512xf32>
    %39 = arith.truncf %36 : vector<8x128xf32> to vector<8x128xbf16>
    %cst_22 = arith.constant dense<0.000000e+00> : vector<8x512xf32>
    %40 = tpu.matmul %39, %14, %cst_22 {dimension_numbers = #tpu.dot_dimension_numbers<[1], [0], [0], [1], [0, 0, 1, 1], [], []>} : vector<8x128xbf16>, vector<128x512xbf16>, vector<8x512xf32> -> vector<8x512xf32>
    %41 = arith.addf %38, %40 : vector<8x512xf32>
    %42 = vector.extract_strided_slice %41 {offsets = [0, 0], sizes = [8, 384], strides = [1, 1]} : vector<8x512xf32> to vector<8x384xf32>
    %43 = arith.negf %42 : vector<8x384xf32>
    %44 = math.exp %43 : vector<8x384xf32>
    %cst_23 = arith.constant 1.000000e+00 : f32
    %45 = vector.broadcast %cst_23 : f32 to vector<8x384xf32>
    %46 = arith.addf %45, %44 : vector<8x384xf32>
    %47 = arith.divf %45, %46 : vector<8x384xf32>
    %48 = vector.extract_strided_slice %41 {offsets = [0, 384], sizes = [8, 128], strides = [1, 1]} : vector<8x512xf32> to vector<8x128xf32>
    %49 = math.tanh %48 : vector<8x128xf32>
    %50 = vector.extract_strided_slice %47 {offsets = [0, 128], sizes = [8, 128], strides = [1, 1]} : vector<8x384xf32> to vector<8x128xf32>
    %51 = arith.mulf %50, %33 : vector<8x128xf32>
    %52 = vector.extract_strided_slice %47 {offsets = [0, 0], sizes = [8, 128], strides = [1, 1]} : vector<8x384xf32> to vector<8x128xf32>
    %53 = arith.mulf %52, %49 : vector<8x128xf32>
    %54 = arith.addf %51, %53 : vector<8x128xf32>
    %55 = vector.extract_strided_slice %47 {offsets = [0, 256], sizes = [8, 128], strides = [1, 1]} : vector<8x384xf32> to vector<8x128xf32>
    %56 = math.tanh %54 : vector<8x128xf32>
    %57 = arith.mulf %55, %56 : vector<8x128xf32>
    %c8_24 = arith.constant 8 : index
    %c0_25 = arith.constant 0 : index
    %58 = vector.load %arg11[%c8_24, %c0_25] : memref<64x128xf32, #tpu.memory_space<vmem>>, vector<8x128xf32>
    tpu.vector_store %arg11[%c8_24, %c0_25], %57 {strides = array<i32>} : memref<64x128xf32, #tpu.memory_space<vmem>>, vector<8x128xf32>,
    %c16 = arith.constant 16 : index
    %c0_26 = arith.constant 0 : index
    %59 = vector.load %arg12[%c16, %c0_26] : memref<64x512xf32, #tpu.memory_space<vmem>>, vector<8x512xf32>
    %60 = arith.truncf %57 : vector<8x128xf32> to vector<8x128xbf16>
    %cst_27 = arith.constant dense<0.000000e+00> : vector<8x512xf32>
    %61 = tpu.matmul %60, %14, %cst_27 {dimension_numbers = #tpu.dot_dimension_numbers<[1], [0], [0], [1], [0, 0, 1, 1], [], []>} : vector<8x128xbf16>, vector<128x512xbf16>, vector<8x512xf32> -> vector<8x512xf32>
    %62 = arith.addf %59, %61 : vector<8x512xf32>
    %63 = vector.extract_strided_slice %62 {offsets = [0, 0], sizes = [8, 384], strides = [1, 1]} : vector<8x512xf32> to vector<8x384xf32>
    %64 = arith.negf %63 : vector<8x384xf32>
    %65 = math.exp %64 : vector<8x384xf32>
    %cst_28 = arith.constant 1.000000e+00 : f32
    %66 = vector.broadcast %cst_28 : f32 to vector<8x384xf32>
    %67 = arith.addf %66, %65 : vector<8x384xf32>
    %68 = arith.divf %66, %67 : vector<8x384xf32>
    %69 = vector.extract_strided_slice %62 {offsets = [0, 384], sizes = [8, 128], strides = [1, 1]} : vector<8x512xf32> to vector<8x128xf32>
    %70 = math.tanh %69 : vector<8x128xf32>
    %71 = vector.extract_strided_slice %68 {offsets = [0, 128], sizes = [8, 128], strides = [1, 1]} : vector<8x384xf32> to vector<8x128xf32>
    %72 = arith.mulf %71, %54 : vector<8x128xf32>
    %73 = vector.extract_strided_slice %68 {offsets = [0, 0], sizes = [8, 128], strides = [1, 1]} : vector<8x384xf32> to vector<8x128xf32>
    %74 = arith.mulf %73, %70 : vector<8x128xf32>
    %75 = arith.addf %72, %74 : vector<8x128xf32>
    %76 = vector.extract_strided_slice %68 {offsets = [0, 256], sizes = [8, 128], strides = [1, 1]} : vector<8x384xf32> to vector<8x128xf32>
    %77 = math.tanh %75 : vector<8x128xf32>
    %78 = arith.mulf %76, %77 : vector<8x128xf32>
    %c16_29 = arith.constant 16 : index
    %c0_30 = arith.constant 0 : index
    %79 = vector.load %arg11[%c16_29, %c0_30] : memref<64x128xf32, #tpu.memory_space<vmem>>, vector<8x128xf32>
    tpu.vector_store %arg11[%c16_29, %c0_30], %78 {strides = array<i32>} : memref<64x128xf32, #tpu.memory_space<vmem>>, vector<8x128xf32>,
    %c24 = arith.constant 24 : index
    %c0_31 = arith.constant 0 : index
    %80 = vector.load %arg12[%c24, %c0_31] : memref<64x512xf32, #tpu.memory_space<vmem>>, vector<8x512xf32>
    %81 = arith.truncf %78 : vector<8x128xf32> to vector<8x128xbf16>
    %cst_32 = arith.constant dense<0.000000e+00> : vector<8x512xf32>
    %82 = tpu.matmul %81, %14, %cst_32 {dimension_numbers = #tpu.dot_dimension_numbers<[1], [0], [0], [1], [0, 0, 1, 1], [], []>} : vector<8x128xbf16>, vector<128x512xbf16>, vector<8x512xf32> -> vector<8x512xf32>
    %83 = arith.addf %80, %82 : vector<8x512xf32>
    %84 = vector.extract_strided_slice %83 {offsets = [0, 0], sizes = [8, 384], strides = [1, 1]} : vector<8x512xf32> to vector<8x384xf32>
    %85 = arith.negf %84 : vector<8x384xf32>
    %86 = math.exp %85 : vector<8x384xf32>
    %cst_33 = arith.constant 1.000000e+00 : f32
    %87 = vector.broadcast %cst_33 : f32 to vector<8x384xf32>
    %88 = arith.addf %87, %86 : vector<8x384xf32>
    %89 = arith.divf %87, %88 : vector<8x384xf32>
    %90 = vector.extract_strided_slice %83 {offsets = [0, 384], sizes = [8, 128], strides = [1, 1]} : vector<8x512xf32> to vector<8x128xf32>
    %91 = math.tanh %90 : vector<8x128xf32>
    %92 = vector.extract_strided_slice %89 {offsets = [0, 128], sizes = [8, 128], strides = [1, 1]} : vector<8x384xf32> to vector<8x128xf32>
    %93 = arith.mulf %92, %75 : vector<8x128xf32>
    %94 = vector.extract_strided_slice %89 {offsets = [0, 0], sizes = [8, 128], strides = [1, 1]} : vector<8x384xf32> to vector<8x128xf32>
    %95 = arith.mulf %94, %91 : vector<8x128xf32>
    %96 = arith.addf %93, %95 : vector<8x128xf32>
    %97 = vector.extract_strided_slice %89 {offsets = [0, 256], sizes = [8, 128], strides = [1, 1]} : vector<8x384xf32> to vector<8x128xf32>
    %98 = math.tanh %96 : vector<8x128xf32>
    %99 = arith.mulf %97, %98 : vector<8x128xf32>
    %c24_34 = arith.constant 24 : index
    %c0_35 = arith.constant 0 : index
    %100 = vector.load %arg11[%c24_34, %c0_35] : memref<64x128xf32, #tpu.memory_space<vmem>>, vector<8x128xf32>
    tpu.vector_store %arg11[%c24_34, %c0_35], %99 {strides = array<i32>} : memref<64x128xf32, #tpu.memory_space<vmem>>, vector<8x128xf32>,
    %c32 = arith.constant 32 : index
    %c0_36 = arith.constant 0 : index
    %101 = vector.load %arg12[%c32, %c0_36] : memref<64x512xf32, #tpu.memory_space<vmem>>, vector<8x512xf32>
    %102 = arith.truncf %99 : vector<8x128xf32> to vector<8x128xbf16>
    %cst_37 = arith.constant dense<0.000000e+00> : vector<8x512xf32>
    %103 = tpu.matmul %102, %14, %cst_37 {dimension_numbers = #tpu.dot_dimension_numbers<[1], [0], [0], [1], [0, 0, 1, 1], [], []>} : vector<8x128xbf16>, vector<128x512xbf16>, vector<8x512xf32> -> vector<8x512xf32>
    %104 = arith.addf %101, %103 : vector<8x512xf32>
    %105 = vector.extract_strided_slice %104 {offsets = [0, 0], sizes = [8, 384], strides = [1, 1]} : vector<8x512xf32> to vector<8x384xf32>
    %106 = arith.negf %105 : vector<8x384xf32>
    %107 = math.exp %106 : vector<8x384xf32>
    %cst_38 = arith.constant 1.000000e+00 : f32
    %108 = vector.broadcast %cst_38 : f32 to vector<8x384xf32>
    %109 = arith.addf %108, %107 : vector<8x384xf32>
    %110 = arith.divf %108, %109 : vector<8x384xf32>
    %111 = vector.extract_strided_slice %104 {offsets = [0, 384], sizes = [8, 128], strides = [1, 1]} : vector<8x512xf32> to vector<8x128xf32>
    %112 = math.tanh %111 : vector<8x128xf32>
    %113 = vector.extract_strided_slice %110 {offsets = [0, 128], sizes = [8, 128], strides = [1, 1]} : vector<8x384xf32> to vector<8x128xf32>
    %114 = arith.mulf %113, %96 : vector<8x128xf32>
    %115 = vector.extract_strided_slice %110 {offsets = [0, 0], sizes = [8, 128], strides = [1, 1]} : vector<8x384xf32> to vector<8x128xf32>
    %116 = arith.mulf %115, %112 : vector<8x128xf32>
    %117 = arith.addf %114, %116 : vector<8x128xf32>
    %118 = vector.extract_strided_slice %110 {offsets = [0, 256], sizes = [8, 128], strides = [1, 1]} : vector<8x384xf32> to vector<8x128xf32>
    %119 = math.tanh %117 : vector<8x128xf32>
    %120 = arith.mulf %118, %119 : vector<8x128xf32>
    %c32_39 = arith.constant 32 : index
    %c0_40 = arith.constant 0 : index
    %121 = vector.load %arg11[%c32_39, %c0_40] : memref<64x128xf32, #tpu.memory_space<vmem>>, vector<8x128xf32>
    tpu.vector_store %arg11[%c32_39, %c0_40], %120 {strides = array<i32>} : memref<64x128xf32, #tpu.memory_space<vmem>>, vector<8x128xf32>,
    %c40 = arith.constant 40 : index
    %c0_41 = arith.constant 0 : index
    %122 = vector.load %arg12[%c40, %c0_41] : memref<64x512xf32, #tpu.memory_space<vmem>>, vector<8x512xf32>
    %123 = arith.truncf %120 : vector<8x128xf32> to vector<8x128xbf16>
    %cst_42 = arith.constant dense<0.000000e+00> : vector<8x512xf32>
    %124 = tpu.matmul %123, %14, %cst_42 {dimension_numbers = #tpu.dot_dimension_numbers<[1], [0], [0], [1], [0, 0, 1, 1], [], []>} : vector<8x128xbf16>, vector<128x512xbf16>, vector<8x512xf32> -> vector<8x512xf32>
    %125 = arith.addf %122, %124 : vector<8x512xf32>
    %126 = vector.extract_strided_slice %125 {offsets = [0, 0], sizes = [8, 384], strides = [1, 1]} : vector<8x512xf32> to vector<8x384xf32>
    %127 = arith.negf %126 : vector<8x384xf32>
    %128 = math.exp %127 : vector<8x384xf32>
    %cst_43 = arith.constant 1.000000e+00 : f32
    %129 = vector.broadcast %cst_43 : f32 to vector<8x384xf32>
    %130 = arith.addf %129, %128 : vector<8x384xf32>
    %131 = arith.divf %129, %130 : vector<8x384xf32>
    %132 = vector.extract_strided_slice %125 {offsets = [0, 384], sizes = [8, 128], strides = [1, 1]} : vector<8x512xf32> to vector<8x128xf32>
    %133 = math.tanh %132 : vector<8x128xf32>
    %134 = vector.extract_strided_slice %131 {offsets = [0, 128], sizes = [8, 128], strides = [1, 1]} : vector<8x384xf32> to vector<8x128xf32>
    %135 = arith.mulf %134, %117 : vector<8x128xf32>
    %136 = vector.extract_strided_slice %131 {offsets = [0, 0], sizes = [8, 128], strides = [1, 1]} : vector<8x384xf32> to vector<8x128xf32>
    %137 = arith.mulf %136, %133 : vector<8x128xf32>
    %138 = arith.addf %135, %137 : vector<8x128xf32>
    %139 = vector.extract_strided_slice %131 {offsets = [0, 256], sizes = [8, 128], strides = [1, 1]} : vector<8x384xf32> to vector<8x128xf32>
    %140 = math.tanh %138 : vector<8x128xf32>
    %141 = arith.mulf %139, %140 : vector<8x128xf32>
    %c40_44 = arith.constant 40 : index
    %c0_45 = arith.constant 0 : index
    %142 = vector.load %arg11[%c40_44, %c0_45] : memref<64x128xf32, #tpu.memory_space<vmem>>, vector<8x128xf32>
    tpu.vector_store %arg11[%c40_44, %c0_45], %141 {strides = array<i32>} : memref<64x128xf32, #tpu.memory_space<vmem>>, vector<8x128xf32>,
    %c48 = arith.constant 48 : index
    %c0_46 = arith.constant 0 : index
    %143 = vector.load %arg12[%c48, %c0_46] : memref<64x512xf32, #tpu.memory_space<vmem>>, vector<8x512xf32>
    %144 = arith.truncf %141 : vector<8x128xf32> to vector<8x128xbf16>
    %cst_47 = arith.constant dense<0.000000e+00> : vector<8x512xf32>
    %145 = tpu.matmul %144, %14, %cst_47 {dimension_numbers = #tpu.dot_dimension_numbers<[1], [0], [0], [1], [0, 0, 1, 1], [], []>} : vector<8x128xbf16>, vector<128x512xbf16>, vector<8x512xf32> -> vector<8x512xf32>
    %146 = arith.addf %143, %145 : vector<8x512xf32>
    %147 = vector.extract_strided_slice %146 {offsets = [0, 0], sizes = [8, 384], strides = [1, 1]} : vector<8x512xf32> to vector<8x384xf32>
    %148 = arith.negf %147 : vector<8x384xf32>
    %149 = math.exp %148 : vector<8x384xf32>
    %cst_48 = arith.constant 1.000000e+00 : f32
    %150 = vector.broadcast %cst_48 : f32 to vector<8x384xf32>
    %151 = arith.addf %150, %149 : vector<8x384xf32>
    %152 = arith.divf %150, %151 : vector<8x384xf32>
    %153 = vector.extract_strided_slice %146 {offsets = [0, 384], sizes = [8, 128], strides = [1, 1]} : vector<8x512xf32> to vector<8x128xf32>
    %154 = math.tanh %153 : vector<8x128xf32>
    %155 = vector.extract_strided_slice %152 {offsets = [0, 128], sizes = [8, 128], strides = [1, 1]} : vector<8x384xf32> to vector<8x128xf32>
    %156 = arith.mulf %155, %138 : vector<8x128xf32>
    %157 = vector.extract_strided_slice %152 {offsets = [0, 0], sizes = [8, 128], strides = [1, 1]} : vector<8x384xf32> to vector<8x128xf32>
    %158 = arith.mulf %157, %154 : vector<8x128xf32>
    %159 = arith.addf %156, %158 : vector<8x128xf32>
    %160 = vector.extract_strided_slice %152 {offsets = [0, 256], sizes = [8, 128], strides = [1, 1]} : vector<8x384xf32> to vector<8x128xf32>
    %161 = math.tanh %159 : vector<8x128xf32>
    %162 = arith.mulf %160, %161 : vector<8x128xf32>
    %c48_49 = arith.constant 48 : index
    %c0_50 = arith.constant 0 : index
    %163 = vector.load %arg11[%c48_49, %c0_50] : memref<64x128xf32, #tpu.memory_space<vmem>>, vector<8x128xf32>
    tpu.vector_store %arg11[%c48_49, %c0_50], %162 {strides = array<i32>} : memref<64x128xf32, #tpu.memory_space<vmem>>, vector<8x128xf32>,
    %c56 = arith.constant 56 : index
    %c0_51 = arith.constant 0 : index
    %164 = vector.load %arg12[%c56, %c0_51] : memref<64x512xf32, #tpu.memory_space<vmem>>, vector<8x512xf32>
    %165 = arith.truncf %162 : vector<8x128xf32> to vector<8x128xbf16>
    %cst_52 = arith.constant dense<0.000000e+00> : vector<8x512xf32>
    %166 = tpu.matmul %165, %14, %cst_52 {dimension_numbers = #tpu.dot_dimension_numbers<[1], [0], [0], [1], [0, 0, 1, 1], [], []>} : vector<8x128xbf16>, vector<128x512xbf16>, vector<8x512xf32> -> vector<8x512xf32>
    %167 = arith.addf %164, %166 : vector<8x512xf32>
    %168 = vector.extract_strided_slice %167 {offsets = [0, 0], sizes = [8, 384], strides = [1, 1]} : vector<8x512xf32> to vector<8x384xf32>
    %169 = arith.negf %168 : vector<8x384xf32>
    %170 = math.exp %169 : vector<8x384xf32>
    %cst_53 = arith.constant 1.000000e+00 : f32
    %171 = vector.broadcast %cst_53 : f32 to vector<8x384xf32>
    %172 = arith.addf %171, %170 : vector<8x384xf32>
    %173 = arith.divf %171, %172 : vector<8x384xf32>
    %174 = vector.extract_strided_slice %167 {offsets = [0, 384], sizes = [8, 128], strides = [1, 1]} : vector<8x512xf32> to vector<8x128xf32>
    %175 = math.tanh %174 : vector<8x128xf32>
    %176 = vector.extract_strided_slice %173 {offsets = [0, 128], sizes = [8, 128], strides = [1, 1]} : vector<8x384xf32> to vector<8x128xf32>
    %177 = arith.mulf %176, %159 : vector<8x128xf32>
    %178 = vector.extract_strided_slice %173 {offsets = [0, 0], sizes = [8, 128], strides = [1, 1]} : vector<8x384xf32> to vector<8x128xf32>
    %179 = arith.mulf %178, %175 : vector<8x128xf32>
    %180 = arith.addf %177, %179 : vector<8x128xf32>
    %181 = vector.extract_strided_slice %173 {offsets = [0, 256], sizes = [8, 128], strides = [1, 1]} : vector<8x384xf32> to vector<8x128xf32>
    %182 = math.tanh %180 : vector<8x128xf32>
    %183 = arith.mulf %181, %182 : vector<8x128xf32>
    %c56_54 = arith.constant 56 : index
    %c0_55 = arith.constant 0 : index
    %184 = vector.load %arg11[%c56_54, %c0_55] : memref<64x128xf32, #tpu.memory_space<vmem>>, vector<8x128xf32>
    tpu.vector_store %arg11[%c56_54, %c0_55], %183 {strides = array<i32>} : memref<64x128xf32, #tpu.memory_space<vmem>>, vector<8x128xf32>,
    %c2_i32 = arith.constant 2 : i32
    %185 = arith.cmpi eq, %arg0, %c2_i32 : i32
    %186 = arith.extui %185 : i1 to i32
    %c0_i32_56 = arith.constant 0 : i32
    %187 = arith.cmpi ne, %186, %c0_i32_56 : i32
    scf.if %187 {
      %c0_57 = arith.constant 0 : index
      %c0_58 = arith.constant 0 : index
      %188 = vector.load %arg11[%c0_57, %c0_58] : memref<64x128xf32, #tpu.memory_space<vmem>>, vector<64x128xf32>
      %189 = arith.truncf %188 : vector<64x128xf32> to vector<64x128xbf16>
      %c0_59 = arith.constant 0 : index
      %c0_60 = arith.constant 0 : index
      %190 = vector.load %arg6[%c0_59, %c0_60] : memref<128x128xbf16, #tpu.memory_space<vmem>>, vector<128x128xbf16>
      %cst_61 = arith.constant dense<0.000000e+00> : vector<64x128xf32>
      %191 = tpu.matmul %189, %190, %cst_61 {dimension_numbers = #tpu.dot_dimension_numbers<[1], [0], [0], [1], [0, 0, 1, 1], [], []>} : vector<64x128xbf16>, vector<128x128xbf16>, vector<64x128xf32> -> vector<64x128xf32>
      %c0_62 = arith.constant 0 : index
      %c0_63 = arith.constant 0 : index
      %192 = vector.load %arg7[%c0_62, %c0_63] : memref<1x128xf32, #tpu.memory_space<vmem>>, vector<1x128xf32>
      %193 = vector.broadcast %192 : vector<1x128xf32> to vector<64x128xf32>
      %194 = arith.addf %191, %193 : vector<64x128xf32>
      %cst_64 = arith.constant 0.000000e+00 : f32
      %195 = vector.broadcast %cst_64 : f32 to vector<64x128xf32>
      %196 = arith.maximumf %194, %195 : vector<64x128xf32>
      %197 = arith.truncf %196 : vector<64x128xf32> to vector<64x128xbf16>
      %c0_65 = arith.constant 0 : index
      %c0_66 = arith.constant 0 : index
      %198 = vector.load %arg8[%c0_65, %c0_66] : memref<128x128xbf16, #tpu.memory_space<vmem>>, vector<128x128xbf16>
      %cst_67 = arith.constant dense<0.000000e+00> : vector<64x128xf32>
      %199 = tpu.matmul %197, %198, %cst_67 {dimension_numbers = #tpu.dot_dimension_numbers<[1], [0], [0], [1], [0, 0, 1, 1], [], []>} : vector<64x128xbf16>, vector<128x128xbf16>, vector<64x128xf32> -> vector<64x128xf32>
      %c0_68 = arith.constant 0 : index
      %c0_69 = arith.constant 0 : index
      %200 = vector.load %arg9[%c0_68, %c0_69] : memref<1x128xf32, #tpu.memory_space<vmem>>, vector<1x128xf32>
      %201 = vector.broadcast %200 : vector<1x128xf32> to vector<64x128xf32>
      %202 = arith.addf %199, %201 : vector<64x128xf32>
      %c0_70 = arith.constant 0 : index
      %c0_71 = arith.constant 0 : index
      %203 = vector.load %arg10[%c0_70, %c0_71] : memref<64x128xf32, #tpu.memory_space<vmem>>, vector<64x128xf32>
      tpu.vector_store %arg10[%c0_70, %c0_71], %202 {strides = array<i32>} : memref<64x128xf32, #tpu.memory_space<vmem>>, vector<64x128xf32>,
    } else {
    }
    return
  }
  func.func @transform_0(%arg0: i32) -> (i32, i32) {
    %c0_i32 = arith.constant 0 : i32
    %c0_i32_0 = arith.constant 0 : i32
    %c0_i32_1 = arith.constant 0 : i32
    return %c0_i32, %c0_i32_0 : i32, i32
  }
  func.func @transform_1(%arg0: i32) -> (i32, i32) {
    %c0_i32 = arith.constant 0 : i32
    %c0_i32_0 = arith.constant 0 : i32
    %c0_i32_1 = arith.constant 0 : i32
    return %c0_i32, %c0_i32_0 : i32, i32
  }
  func.func @transform_2(%arg0: i32) -> (i32, i32, i32) {
    %c0_i32 = arith.constant 0 : i32
    %c0_i32_0 = arith.constant 0 : i32
    %c0_i32_1 = arith.constant 0 : i32
    return %arg0, %c0_i32, %c0_i32_0 : i32, i32, i32
  }
  func.func @transform_3(%arg0: i32) -> (i32, i32, i32) {
    %c0_i32 = arith.constant 0 : i32
    %c0_i32_0 = arith.constant 0 : i32
    %c0_i32_1 = arith.constant 0 : i32
    return %arg0, %c0_i32, %c0_i32_0 : i32, i32, i32
  }
  func.func @transform_4(%arg0: i32) -> (i32, i32, i32) {
    %c0_i32 = arith.constant 0 : i32
    %c0_i32_0 = arith.constant 0 : i32
    %c0_i32_1 = arith.constant 0 : i32
    return %arg0, %c0_i32, %c0_i32_0 : i32, i32, i32
  }
  func.func @transform_5(%arg0: i32) -> (i32, i32) {
    %c0_i32 = arith.constant 0 : i32
    %c0_i32_0 = arith.constant 0 : i32
    %c0_i32_1 = arith.constant 0 : i32
    return %c0_i32, %c0_i32_0 : i32, i32
  }
  func.func @transform_6(%arg0: i32) -> (i32, i32) {
    %c0_i32 = arith.constant 0 : i32
    %c0_i32_0 = arith.constant 0 : i32
    %c0_i32_1 = arith.constant 0 : i32
    return %c0_i32, %c0_i32_0 : i32, i32
  }
  func.func @transform_7(%arg0: i32) -> (i32, i32) {
    %c0_i32 = arith.constant 0 : i32
    %c0_i32_0 = arith.constant 0 : i32
    %c0_i32_1 = arith.constant 0 : i32
    return %c0_i32, %c0_i32_0 : i32, i32
  }
  func.func @transform_8(%arg0: i32) -> (i32, i32) {
    %c0_i32 = arith.constant 0 : i32
    %c0_i32_0 = arith.constant 0 : i32
    %c0_i32_1 = arith.constant 0 : i32
    return %c0_i32, %c0_i32_0 : i32, i32
  }
  func.func @transform_9(%arg0: i32) -> (i32, i32) {
    %c0_i32 = arith.constant 0 : i32
    %c0_i32_0 = arith.constant 0 : i32
    %c0_i32_1 = arith.constant 0 : i32
    return %c0_i32, %c0_i32_0 : i32, i32
  }
}

</mosaic_0001>

<llo_original>
// kernel: lstm_op_forward.1
$region0: #{lstm_op_forward.1}
  #allocation0 [shape = 'u32[]', space=smem, size = 0x4, offset = 0x4, fixed_abs, tag = 'smem constant byte address 0x4 - core index']
  #allocation1 [shape = 'u32[144,128]{1,0:T(1,128)}', space=vmem, size = 0x12000, scoped, tag = 'internal scratch']
  #allocation2 [shape = 'f32[64,128]{1,0:T(8,128)}', space=vmem, size = 0x8000, scoped, tag = 'scratch operand']
  #allocation3 [shape = 'f32[64,512]{1,0:T(8,128)}', space=vmem, size = 0x20000, scoped, tag = 'scratch operand']
  %s0 = inlined_call_operand.vmem [shape: s32[64,1], index: 0, kind: input, shape index: {}]
  %s1 = inlined_call_operand.vmem [shape: bf16[128,128], index: 1, kind: input, shape index: {}]
  %s2 = inlined_call_operand.hbm [shape: bf16[3,128,512], index: 2, kind: input, shape index: {}]
  %s3 = inlined_call_operand.hbm [shape: bf16[3,128,512], index: 3, kind: input, shape index: {}]
  %s4 = inlined_call_operand.vmem [shape: f32[3,1,512], index: 4, kind: input, shape index: {}]
  %s5 = inlined_call_operand.hbm [shape: bf16[128,128], index: 5, kind: input, shape index: {}]
  %s6 = inlined_call_operand.vmem [shape: f32[1,128], index: 6, kind: input, shape index: {}]
  %s7 = inlined_call_operand.hbm [shape: bf16[128,128], index: 7, kind: input, shape index: {}]
  %s8 = inlined_call_operand.vmem [shape: f32[1,128], index: 8, kind: input, shape index: {}]
  %s9 = inlined_call_operand.vmem [shape: f32[64,128], index: 9, kind: output, shape index: {}]
  %s10 = sld [smem:[#allocation0]]
  $region93: #{lstm_op_forward.1} parent=0
    _
  %s12 = ssub.s32 1, %s10
  %s13 = scalar_select 0, %s12, %s10
  $region1: #{lstm_op_forward.1} parent=0
    #allocation4 [shape = 'u8[262144]{0}', space=vmem, size = 0x40000, scoped, tag = 'input window, operand 2']
    #allocation5 [shape = 's32[2]{0}', space=sflag, size = 0x8, scoped, tag = 'scoped memory for lstm_op_forward.1']
    #allocation6 [shape = 'u8[262144]{0}', space=vmem, size = 0x40000, scoped, tag = 'input window, operand 3']
    #allocation7 [shape = 's32[2]{0}', space=sflag, size = 0x8, scoped, tag = 'scoped memory for lstm_op_forward.1']
    #allocation8 [shape = 'u8[32768]{0}', space=vmem, size = 0x8000, scoped, tag = 'input window, operand 5, single buffered']
    #allocation9 [shape = 'u8[32768]{0}', space=vmem, size = 0x8000, scoped, tag = 'input window, operand 7, single buffered']
    #allocation10 [shape = 's32[1]{0}', space=sflag, size = 0x4, scoped, tag = 'scoped memory for lstm_op_forward.1']
    %14 = vsyncpa [#allocation5], 0
    %s15 = scalar_lea.sflag [#allocation5], 1
    %16 = vsyncpa %s15, 0
    %17 = vsyncpa [#allocation7], 0
    %s18 = scalar_lea.sflag [#allocation7], 1
    %19 = vsyncpa %s18, 0
    %20 = vsyncpa [#allocation10], 0
    loop: start=0, step=1, limit=5
    $region2: #{lstm_op_forward.1} parent=1 // loop_pre_header
      _
    $region3: #{lstm_op_forward.1} parent=1 // loop_header
      %s22 = sphi 0, %s26
      %p23 = scmp.ge.s32.totalorder %s22, 5
      %s30 = sphi 0, %s30
      %s32 = sphi 0, %s30
      %s33 = sphi 0, %s32
      %s47 = sphi 0, %s33
      %s51 = sphi 0, %s51
      %s53 = sphi 0, %s51
      %s54 = sphi 0, %s53
      %s68 = sphi 0, %s54
      %s74 = sphi 0, %s76
      %s77 = sphi 0, %s74
      %s78 = sphi 0, %s77
      %s94 = sphi 0, %s78
      %s100 = sphi 0, %s102
      %s103 = sphi 0, %s100
      %s104 = sphi 0, %s103
      %s120 = sphi 0, %s104
      %s126 = sphi 0, %s128
      %s129 = sphi 0, %s126
      %s130 = sphi 0, %s129
      %s146 = sphi 0, %s130
      %s150 = sphi 0, %s150
      %s152 = sphi 0, %s150
      %s153 = sphi 0, %s152
      %s167 = sphi 0, %s153
      %s171 = sphi 0, %s171
      %s173 = sphi 0, %s171
      %s174 = sphi 0, %s173
      %s188 = sphi 0, %s174
      %s192 = sphi 0, %s192
      %s194 = sphi 0, %s192
      %s195 = sphi 0, %s194
      %s209 = sphi 0, %s195
      %s213 = sphi 0, %s213
      %s215 = sphi 0, %s213
      %s216 = sphi 0, %s215
      %s230 = sphi 0, %s216
      %s234 = sphi 0, %s234
      %s236 = sphi 0, %s234
      %s237 = sphi 0, %s236
      %s251 = sphi 0, %s237
    $region4: #{lstm_op_forward.1} parent=1 // loop_header_branch
      %25 = sbr.rel (%p23) target = $region8
    $region5: #{lstm_op_forward.1} parent=1 // loop_body
      %s27 = ssub.s32 %s22, 1
      %s28 = ssub.s32 %s22, 2
      %s29 = sadd.s32 %s22, 1
      %s31 = sadd.s32 %s30, 1
      %p34 = scmp.eq.s32.totalorder %s22, 2
      %p35 = scmp.ne.s32.totalorder %s30, %s32
      %p36 = scmp.eq.s32.totalorder %s22, 0
      %p37 = por %p35, %p36
      %p38 = scmp.ne.s32.totalorder %s30, %s32
      %p39 = scmp.eq.s32.totalorder %s27, 2
      %p40 = por %p38, %p39
      %p41 = scmp.ne.s32.totalorder %s32, %s33
      %p42 = scmp.eq.s32.totalorder %s27, 0
      %p43 = por %p41, %p42
      %p44 = scmp.ne.s32.totalorder %s32, %s33
      %p45 = scmp.eq.s32.totalorder %s28, 2
      %p46 = por %p44, %p45
      %p48 = scmp.ne.s32.totalorder %s33, %s47
      %p49 = scmp.eq.s32.totalorder %s28, 0
      %p50 = por %p48, %p49
      %s52 = sadd.s32 %s51, 1
      %p55 = scmp.eq.s32.totalorder %s22, 2
      %p56 = scmp.ne.s32.totalorder %s51, %s53
      %p57 = scmp.eq.s32.totalorder %s22, 0
      %p58 = por %p56, %p57
      %p59 = scmp.ne.s32.totalorder %s51, %s53
      %p60 = scmp.eq.s32.totalorder %s27, 2
      %p61 = por %p59, %p60
      %p62 = scmp.ne.s32.totalorder %s53, %s54
      %p63 = scmp.eq.s32.totalorder %s27, 0
      %p64 = por %p62, %p63
      %p65 = scmp.ne.s32.totalorder %s53, %s54
      %p66 = scmp.eq.s32.totalorder %s28, 2
      %p67 = por %p65, %p66
      %p69 = scmp.ne.s32.totalorder %s54, %s68
      %p70 = scmp.eq.s32.totalorder %s28, 0
      %p71 = por %p69, %p70
      %s72 = ssub.s32 %s22, %s29
      %p73 = scmp.eq.s32.totalorder %s72, 0
      %s75 = sadd.s32 %s74, 1
      %s76 = scalar_select %p73, %s74, %s75
      %p79 = pneg %p73
      %p80 = scmp.eq.s32.totalorder %s22, 2
      %p81 = por %p79, %p80
      %p82 = scmp.ne.s32.totalorder %s74, %s77
      %p83 = scmp.eq.s32.totalorder %s22, 0
      %p84 = por %p82, %p83
      %p85 = scmp.ne.s32.totalorder %s74, %s77
      %p86 = scmp.eq.s32.totalorder %s27, 2
      %p87 = por %p85, %p86
      %p88 = scmp.ne.s32.totalorder %s77, %s78
      %p89 = scmp.eq.s32.totalorder %s27, 0
      %p90 = por %p88, %p89
      %p91 = scmp.ne.s32.totalorder %s77, %s78
      %p92 = scmp.eq.s32.totalorder %s28, 2
      %p93 = por %p91, %p92
      %p95 = scmp.ne.s32.totalorder %s78, %s94
      %p96 = scmp.eq.s32.totalorder %s28, 0
      %p97 = por %p95, %p96
      %s98 = ssub.s32 %s22, %s29
      %p99 = scmp.eq.s32.totalorder %s98, 0
      %s101 = sadd.s32 %s100, 1
      %s102 = scalar_select %p99, %s100, %s101
      %p105 = pneg %p99
      %p106 = scmp.eq.s32.totalorder %s22, 2
      %p107 = por %p105, %p106
      %p108 = scmp.ne.s32.totalorder %s100, %s103
      %p109 = scmp.eq.s32.totalorder %s22, 0
      %p110 = por %p108, %p109
      %p111 = scmp.ne.s32.totalorder %s100, %s103
      %p112 = scmp.eq.s32.totalorder %s27, 2
      %p113 = por %p111, %p112
      %p114 = scmp.ne.s32.totalorder %s103, %s104
      %p115 = scmp.eq.s32.totalorder %s27, 0
      %p116 = por %p114, %p115
      %p117 = scmp.ne.s32.totalorder %s103, %s104
      %p118 = scmp.eq.s32.totalorder %s28, 2
      %p119 = por %p117, %p118
      %p121 = scmp.ne.s32.totalorder %s104, %s120
      %p122 = scmp.eq.s32.totalorder %s28, 0
      %p123 = por %p121, %p122
      %s124 = ssub.s32 %s22, %s29
      %p125 = scmp.eq.s32.totalorder %s124, 0
      %s127 = sadd.s32 %s126, 1
      %s128 = scalar_select %p125, %s126, %s127
      %p131 = pneg %p125
      %p132 = scmp.eq.s32.totalorder %s22, 2
      %p133 = por %p131, %p132
      %p134 = scmp.ne.s32.totalorder %s126, %s129
      %p135 = scmp.eq.s32.totalorder %s22, 0
      %p136 = por %p134, %p135
      %p137 = scmp.ne.s32.totalorder %s126, %s129
      %p138 = scmp.eq.s32.totalorder %s27, 2
      %p139 = por %p137, %p138
      %p140 = scmp.ne.s32.totalorder %s129, %s130
      %p141 = scmp.eq.s32.totalorder %s27, 0
      %p142 = por %p140, %p141
      %p143 = scmp.ne.s32.totalorder %s129, %s130
      %p144 = scmp.eq.s32.totalorder %s28, 2
      %p145 = por %p143, %p144
      %p147 = scmp.ne.s32.totalorder %s130, %s146
      %p148 = scmp.eq.s32.totalorder %s28, 0
      %p149 = por %p147, %p148
      %s151 = sadd.s32 %s150, 1
      %p154 = scmp.eq.s32.totalorder %s22, 2
      %p155 = scmp.ne.s32.totalorder %s150, %s152
      %p156 = scmp.eq.s32.totalorder %s22, 0
      %p157 = por %p155, %p156
      %p158 = scmp.ne.s32.totalorder %s150, %s152
      %p159 = scmp.eq.s32.totalorder %s27, 2
      %p160 = por %p158, %p159
      %p161 = scmp.ne.s32.totalorder %s152, %s153
      %p162 = scmp.eq.s32.totalorder %s27, 0
      %p163 = por %p161, %p162
      %p164 = scmp.ne.s32.totalorder %s152, %s153
      %p165 = scmp.eq.s32.totalorder %s28, 2
      %p166 = por %p164, %p165
      %p168 = scmp.ne.s32.totalorder %s153, %s167
      %p169 = scmp.eq.s32.totalorder %s28, 0
      %p170 = por %p168, %p169
      %s172 = sadd.s32 %s171, 1
      %p175 = scmp.eq.s32.totalorder %s22, 2
      %p176 = scmp.ne.s32.totalorder %s171, %s173
      %p177 = scmp.eq.s32.totalorder %s22, 0
      %p178 = por %p176, %p177
      %p179 = scmp.ne.s32.totalorder %s171, %s173
      %p180 = scmp.eq.s32.totalorder %s27, 2
      %p181 = por %p179, %p180
      %p182 = scmp.ne.s32.totalorder %s173, %s174
      %p183 = scmp.eq.s32.totalorder %s27, 0
      %p184 = por %p182, %p183
      %p185 = scmp.ne.s32.totalorder %s173, %s174
      %p186 = scmp.eq.s32.totalorder %s28, 2
      %p187 = por %p185, %p186
      %p189 = scmp.ne.s32.totalorder %s174, %s188
      %p190 = scmp.eq.s32.totalorder %s28, 0
      %p191 = por %p189, %p190
      %s193 = sadd.s32 %s192, 1
      %p196 = scmp.eq.s32.totalorder %s22, 2
      %p197 = scmp.ne.s32.totalorder %s192, %s194
      %p198 = scmp.eq.s32.totalorder %s22, 0
      %p199 = por %p197, %p198
      %p200 = scmp.ne.s32.totalorder %s192, %s194
      %p201 = scmp.eq.s32.totalorder %s27, 2
      %p202 = por %p200, %p201
      %p203 = scmp.ne.s32.totalorder %s194, %s195
      %p204 = scmp.eq.s32.totalorder %s27, 0
      %p205 = por %p203, %p204
      %p206 = scmp.ne.s32.totalorder %s194, %s195
      %p207 = scmp.eq.s32.totalorder %s28, 2
      %p208 = por %p206, %p207
      %p210 = scmp.ne.s32.totalorder %s195, %s209
      %p211 = scmp.eq.s32.totalorder %s28, 0
      %p212 = por %p210, %p211
      %s214 = sadd.s32 %s213, 1
      %p217 = scmp.eq.s32.totalorder %s22, 2
      %p218 = scmp.ne.s32.totalorder %s213, %s215
      %p219 = scmp.eq.s32.totalorder %s22, 0
      %p220 = por %p218, %p219
      %p221 = scmp.ne.s32.totalorder %s213, %s215
      %p222 = scmp.eq.s32.totalorder %s27, 2
      %p223 = por %p221, %p222
      %p224 = scmp.ne.s32.totalorder %s215, %s216
      %p225 = scmp.eq.s32.totalorder %s27, 0
      %p226 = por %p224, %p225
      %p227 = scmp.ne.s32.totalorder %s215, %s216
      %p228 = scmp.eq.s32.totalorder %s28, 2
      %p229 = por %p227, %p228
      %p231 = scmp.ne.s32.totalorder %s216, %s230
      %p232 = scmp.eq.s32.totalorder %s28, 0
      %p233 = por %p231, %p232
      %s235 = sadd.s32 %s234, 1
      %p238 = scmp.eq.s32.totalorder %s22, 2
      %p239 = scmp.ne.s32.totalorder %s234, %s236
      %p240 = scmp.eq.s32.totalorder %s22, 0
      %p241 = por %p239, %p240
      %p242 = scmp.ne.s32.totalorder %s234, %s236
      %p243 = scmp.eq.s32.totalorder %s27, 2
      %p244 = por %p242, %p243
      %p245 = scmp.ne.s32.totalorder %s236, %s237
      %p246 = scmp.eq.s32.totalorder %s27, 0
      %p247 = por %p245, %p246
      %p248 = scmp.ne.s32.totalorder %s236, %s237
      %p249 = scmp.eq.s32.totalorder %s28, 2
      %p250 = por %p248, %p249
      %p252 = scmp.ne.s32.totalorder %s237, %s251
      %p253 = scmp.eq.s32.totalorder %s28, 0
      %p254 = por %p252, %p253
      %p255 = scmp.le.s32.totalorder 1, %s22
      %p256 = scmp.lt.s32.totalorder %s22, 4
      %p257 = pnand %p255, %p256
      %p258 = pneg %p257
      // Predicated region
      $region9: #{lstm_op_forward.1} parent=5 // pred_check
        _
      $region10: #{lstm_op_forward.1} parent=5 // pred_check_branch
        %260 = sbr.rel (%p257) target = $region12
      $region11: #{lstm_op_forward.1} parent=5 // pred_region
        %s261 = ssub.s32 %s22, 1
        // Predicated region
        $region13: #{lstm_op_forward.1} parent=11 // pred_check
          %p262 = pneg %p43
        $region14: #{lstm_op_forward.1} parent=11 // pred_check_branch
          %264 = sbr.rel (%p262) target = $region16
        $region15: #{lstm_op_forward.1} parent=11 // pred_region
          _
        $region16: #{lstm_op_forward.1} parent=11 // pred_fallthru
          _
        // Predicated region
        $region17: #{lstm_op_forward.1} parent=11 // pred_check
          %p265 = pneg %p64
        $region18: #{lstm_op_forward.1} parent=11 // pred_check_branch
          %267 = sbr.rel (%p265) target = $region20
        $region19: #{lstm_op_forward.1} parent=11 // pred_region
          _
        $region20: #{lstm_op_forward.1} parent=11 // pred_fallthru
          _
        // Predicated region
        $region21: #{lstm_op_forward.1} parent=11 // pred_check
          %p268 = pneg %p163
        $region22: #{lstm_op_forward.1} parent=11 // pred_check_branch
          %270 = sbr.rel (%p268) target = $region24
        $region23: #{lstm_op_forward.1} parent=11 // pred_region
          %s272 = ssub.s32 1024, 1024
          %273 = vsyncadd [#allocation7], %s272
          %s274 = sshll.u32 [#allocation8], 4
          %s275 = int_to_ptr.vmem [resolvable:$true] %s274
          %280 = dma.hbm_to_vmem [thread:$0]  %s5, 1024, %s275, [#allocation7], 64, 64, 4
        $region24: #{lstm_op_forward.1} parent=11 // pred_fallthru
          _
        // Predicated region
        $region25: #{lstm_op_forward.1} parent=11 // pred_check
          %p281 = pneg %p184
        $region26: #{lstm_op_forward.1} parent=11 // pred_check_branch
          %283 = sbr.rel (%p281) target = $region28
        $region27: #{lstm_op_forward.1} parent=11 // pred_region
          _
        $region28: #{lstm_op_forward.1} parent=11 // pred_fallthru
          _
        // Predicated region
        $region29: #{lstm_op_forward.1} parent=11 // pred_check
          %p284 = pneg %p205
        $region30: #{lstm_op_forward.1} parent=11 // pred_check_branch
          %286 = sbr.rel (%p284) target = $region32
        $region31: #{lstm_op_forward.1} parent=11 // pred_region
          %s288 = ssub.s32 1024, 1024
          %289 = vsyncadd [#allocation10], %s288
          %s290 = sshll.u32 [#allocation9], 4
          %s291 = int_to_ptr.vmem [resolvable:$true] %s290
          %296 = dma.hbm_to_vmem [thread:$0]  %s7, 1024, %s291, [#allocation10], 64, 64, 4
        $region32: #{lstm_op_forward.1} parent=11 // pred_fallthru
          _
        // Predicated region
        $region33: #{lstm_op_forward.1} parent=11 // pred_check
          %p297 = pneg %p226
        $region34: #{lstm_op_forward.1} parent=11 // pred_check_branch
          %299 = sbr.rel (%p297) target = $region36
        $region35: #{lstm_op_forward.1} parent=11 // pred_region
          _
        $region36: #{lstm_op_forward.1} parent=11 // pred_fallthru
          _
      $region12: #{lstm_op_forward.1} parent=5 // pred_fallthru
        _
      %p300 = scmp.lt.s32.totalorder %s22, 3
      // Predicated region
      $region37: #{lstm_op_forward.1} parent=5 // pred_check
        %p301 = pneg %p300
      $region38: #{lstm_op_forward.1} parent=5 // pred_check_branch
        %303 = sbr.rel (%p301) target = $region40
      $region39: #{lstm_op_forward.1} parent=5 // pred_region
        // Predicated region
        $region41: #{lstm_op_forward.1} parent=39 // pred_check
          %p304 = pneg %p84
        $region42: #{lstm_op_forward.1} parent=39 // pred_check_branch
          %306 = sbr.rel (%p304) target = $region44
        $region43: #{lstm_op_forward.1} parent=39 // pred_region
          %s307 = sand.u32 %s74, 1
          %s308 = scalar_lea.sflag [#allocation5], %s307
          %s309 = sand.u32 %s74, 1
          %s310 = smul.addr %s309, 256
          %s311 = scalar_lea.vmem [#allocation4], %s310
          %s313 = ssub.s32 4096, 4096
          %314 = vsyncadd %s308, %s313
          %s315 = smul.addr %s22, 64
          %s316 = smul.addr %s315, 64
          %s317 = scalar_lea.hbm %s2, %s316
          %s318 = sshll.u32 %s311, 4
          %s319 = int_to_ptr.vmem [resolvable:$true] %s318
          %324 = dma.hbm_to_vmem [thread:$0]  %s317, 4096, %s319, %s308, 256, 256, 16
        $region44: #{lstm_op_forward.1} parent=39 // pred_fallthru
          _
        // Predicated region
        $region45: #{lstm_op_forward.1} parent=39 // pred_check
          %p325 = pneg %p110
        $region46: #{lstm_op_forward.1} parent=39 // pred_check_branch
          %327 = sbr.rel (%p325) target = $region48
        $region47: #{lstm_op_forward.1} parent=39 // pred_region
          %s328 = sand.u32 %s22, 1
          %s329 = scalar_lea.sflag [#allocation7], %s328
          %s330 = sand.u32 %s100, 1
          %s331 = smul.addr %s330, 256
          %s332 = scalar_lea.vmem [#allocation6], %s331
          %s334 = ssub.s32 4096, 4096
          %335 = vsyncadd %s329, %s334
          %s336 = smul.addr %s22, 64
          %s337 = smul.addr %s336, 64
          %s338 = scalar_lea.hbm %s3, %s337
          %s339 = sshll.u32 %s332, 4
          %s340 = int_to_ptr.vmem [resolvable:$true] %s339
          %345 = dma.hbm_to_vmem [thread:$0]  %s338, 4096, %s340, %s329, 256, 256, 16
        $region48: #{lstm_op_forward.1} parent=39 // pred_fallthru
          _
        // Predicated region
        $region49: #{lstm_op_forward.1} parent=39 // pred_check
          %p346 = pneg %p136
        $region50: #{lstm_op_forward.1} parent=39 // pred_check_branch
          %348 = sbr.rel (%p346) target = $region52
        $region51: #{lstm_op_forward.1} parent=39 // pred_region
          %p349 = scmp.lt.s32.totalorder %s22, 2
          %s350 = scalar_select %p349, %s22, 2
          %s351 = smul.addr %s350, 4
          %s352 = scalar_lea.vmem %s4, %s351
        $region52: #{lstm_op_forward.1} parent=39 // pred_fallthru
          _
      $region40: #{lstm_op_forward.1} parent=5 // pred_fallthru
        _
      %p353 = scmp.le.s32.totalorder 1, %s22
      %p354 = scmp.lt.s32.totalorder %s22, 4
      %p355 = pnand %p353, %p354
      %p356 = pneg %p355
      // Predicated region
      $region53: #{lstm_op_forward.1} parent=5 // pred_check
        _
      $region54: #{lstm_op_forward.1} parent=5 // pred_check_branch
        %358 = sbr.rel (%p355) target = $region56
      $region55: #{lstm_op_forward.1} parent=5 // pred_region
        %s359 = ssub.s32 %s22, 1
        %s360 = sand.u32 %s77, 1
        %s361 = scalar_lea.sflag [#allocation5], %s360
        %s362 = sand.u32 %s77, 1
        %s363 = smul.addr %s362, 256
        %s364 = scalar_lea.vmem [#allocation4], %s363
        // Predicated region
        $region57: #{lstm_op_forward.1} parent=55 // pred_check
          %p365 = pneg %p90
        $region58: #{lstm_op_forward.1} parent=55 // pred_check_branch
          %367 = sbr.rel (%p365) target = $region60
        $region59: #{lstm_op_forward.1} parent=55 // pred_region
          %368 = dma.done %s361, 4096
        $region60: #{lstm_op_forward.1} parent=55 // pred_fallthru
          _
        %s369 = sand.u32 %s27, 1
        %s370 = scalar_lea.sflag [#allocation7], %s369
        %s371 = sand.u32 %s103, 1
        %s372 = smul.addr %s371, 256
        %s373 = scalar_lea.vmem [#allocation6], %s372
        // Predicated region
        $region61: #{lstm_op_forward.1} parent=55 // pred_check
          %p374 = pneg %p116
        $region62: #{lstm_op_forward.1} parent=55 // pred_check_branch
          %376 = sbr.rel (%p374) target = $region64
        $region63: #{lstm_op_forward.1} parent=55 // pred_region
          %377 = dma.done %s370, 4096
        $region64: #{lstm_op_forward.1} parent=55 // pred_fallthru
          _
        // Predicated region
        $region65: #{lstm_op_forward.1} parent=55 // pred_check
          %p378 = pneg %p163
        $region66: #{lstm_op_forward.1} parent=55 // pred_check_branch
          %380 = sbr.rel (%p378) target = $region68
        $region67: #{lstm_op_forward.1} parent=55 // pred_region
          %381 = dma.done [#allocation7], 1024
        $region68: #{lstm_op_forward.1} parent=55 // pred_fallthru
          _
        // Predicated region
        $region69: #{lstm_op_forward.1} parent=55 // pred_check
          %p382 = pneg %p205
        $region70: #{lstm_op_forward.1} parent=55 // pred_check_branch
          %384 = sbr.rel (%p382) target = $region72
        $region71: #{lstm_op_forward.1} parent=55 // pred_region
          %385 = dma.done [#allocation10], 1024
        $region72: #{lstm_op_forward.1} parent=55 // pred_fallthru
          _
        %p386 = pneg %p43
        %p387 = pneg %p40
        %p388 = pneg %p64
        %p389 = pneg %p61
        %s390 = sand.u32 %s77, 1
        %s391 = scalar_lea.sflag [#allocation5], %s390
        %s392 = sand.u32 %s77, 1
        %s393 = smul.addr %s392, 256
        %s394 = scalar_lea.vmem [#allocation4], %s393
        %p395 = pneg %p90
        %p396 = pneg %p87
        %s397 = sand.u32 %s27, 1
        %s398 = scalar_lea.sflag [#allocation7], %s397
        %s399 = sand.u32 %s103, 1
        %s400 = smul.addr %s399, 256
        %s401 = scalar_lea.vmem [#allocation6], %s400
        %p402 = pneg %p116
        %p403 = pneg %p113
        %p404 = scmp.lt.s32.totalorder %s27, 2
        %s405 = scalar_select %p404, %s27, 2
        %s406 = smul.addr %s405, 4
        %s407 = scalar_lea.vmem %s4, %s406
        %p408 = pneg %p142
        %p409 = pneg %p139
        %p410 = pneg %p163
        %p411 = pneg %p160
        %p412 = pneg %p184
        %p413 = pneg %p181
        %p414 = pneg %p205
        %p415 = pneg %p202
        %p416 = pneg %p226
        %p417 = pneg %p223
        %p418 = pneg %p247
        %p419 = pneg %p244
        %p420 = scmp.lt.s32.totalorder %s27, 2
        %s421 = scalar_select %p420, %s27, 2
        %s422 = smul.addr %s421, 4
        %s423 = scalar_lea.vmem %s4, %s422
        %p425 = scmp.eq.s32.totalorder %s27, 0
        // Predicated region
        $region73: #{lstm_op_forward.1} parent=55 // pred_check
          %p426 = pneg %p425
        $region74: #{lstm_op_forward.1} parent=55 // pred_check_branch
          %428 = sbr.rel (%p426) target = $region76
        $region75: #{lstm_op_forward.1} parent=55 // pred_region
          %v429 = vld [vmem:[%s0] sm:$0xff]
          %v430 = vld [vmem:[%s0 + $0x8] sm:$0xff]
          %v431 = vld [vmem:[%s0 + $0x10] sm:$0xff]
          %v432 = vld [vmem:[%s0 + $0x18] sm:$0xff]
          %v433 = vld [vmem:[%s0 + $0x20] sm:$0xff]
          %v434 = vld [vmem:[%s0 + $0x28] sm:$0xff]
          %v435 = vld [vmem:[%s0 + $0x30] sm:$0xff]
          %v436 = vld [vmem:[%s0 + $0x38] sm:$0xff]
          %v437 = vlaneseq
          %v438 = vand.u32 %v437, 127
          %439 = vset.pattern.permute.xlu0 0
          %440 = vperm.xlu0 %439, %v429
          %v441 = vpop.permute.xlu0 %440
          %442 = vset.pattern.permute.xlu0 0
          %443 = vperm.xlu0 %442, %v430
          %v444 = vpop.permute.xlu0 %443
          %445 = vset.pattern.permute.xlu0 0
          %446 = vperm.xlu0 %445, %v431
          %v447 = vpop.permute.xlu0 %446
          %448 = vset.pattern.permute.xlu0 0
          %449 = vperm.xlu0 %448, %v432
          %v450 = vpop.permute.xlu0 %449
          %451 = vset.pattern.permute.xlu0 0
          %452 = vperm.xlu0 %451, %v433
          %v453 = vpop.permute.xlu0 %452
          %454 = vset.pattern.permute.xlu0 0
          %455 = vperm.xlu0 %454, %v434
          %v456 = vpop.permute.xlu0 %455
          %457 = vset.pattern.permute.xlu0 0
          %458 = vperm.xlu0 %457, %v435
          %v459 = vpop.permute.xlu0 %458
          %460 = vset.pattern.permute.xlu0 0
          %461 = vperm.xlu0 %460, %v436
          %v462 = vpop.permute.xlu0 %461
          %vm463 = vcmp.eq.s32.totalorder %v438, %v441
          %vm464 = vcmp.eq.s32.totalorder %v438, %v444
          %vm465 = vcmp.eq.s32.totalorder %v438, %v447
          %vm466 = vcmp.eq.s32.totalorder %v438, %v450
          %vm467 = vcmp.eq.s32.totalorder %v438, %v453
          %vm468 = vcmp.eq.s32.totalorder %v438, %v456
          %vm469 = vcmp.eq.s32.totalorder %v438, %v459
          %vm470 = vcmp.eq.s32.totalorder %v438, %v462
          %v471 = vsel %vm463, 1, 0
          %v472 = vsel %vm464, 1, 0
          %v473 = vsel %vm465, 1, 0
          %v474 = vsel %vm466, 1, 0
          %v475 = vsel %vm467, 1, 0
          %v476 = vsel %vm468, 1, 0
          %v477 = vsel %vm469, 1, 0
          %v478 = vsel %vm470, 1, 0
          %v479 = vcvt.s32.f32 %v471
          %v480 = vcvt.s32.f32 %v472
          %v481 = vcvt.s32.f32 %v473
          %v482 = vcvt.s32.f32 %v474
          %v483 = vcvt.s32.f32 %v475
          %v484 = vcvt.s32.f32 %v476
          %v485 = vcvt.s32.f32 %v477
          %v486 = vcvt.s32.f32 %v478
          %v487 = vpack.c.bf16 %v480, %v479
          %v488 = vpack.c.bf16 %v482, %v481
          %v489 = vpack.c.bf16 %v484, %v483
          %v490 = vpack.c.bf16 %v486, %v485
          %v491 = vld [vmem:[%s1] sm:$0xf]
          %v492 = vld [vmem:[%s1 + $0x4] sm:$0xf]
          %v493 = vld [vmem:[%s1 + $0x8] sm:$0xf]
          %v494 = vld [vmem:[%s1 + $0xc] sm:$0xf]
          %v495 = vld [vmem:[%s1 + $0x10] sm:$0xf]
          %v496 = vld [vmem:[%s1 + $0x14] sm:$0xf]
          %v497 = vld [vmem:[%s1 + $0x18] sm:$0xf]
          %v498 = vld [vmem:[%s1 + $0x1c] sm:$0xf]
          %v499 = vld [vmem:[%s1 + $0x20] sm:$0xf]
          %v500 = vld [vmem:[%s1 + $0x24] sm:$0xf]
          %v501 = vld [vmem:[%s1 + $0x28] sm:$0xf]
          %v502 = vld [vmem:[%s1 + $0x2c] sm:$0xf]
          %v503 = vld [vmem:[%s1 + $0x30] sm:$0xf]
          %v504 = vld [vmem:[%s1 + $0x34] sm:$0xf]
          %v505 = vld [vmem:[%s1 + $0x38] sm:$0xf]
          %v506 = vld [vmem:[%s1 + $0x3c] sm:$0xf]
          %v523 = vunpack.c.l.b16 %v491
          %v524 = vunpack.c.l.b16 %v492
          %v525 = vunpack.c.l.b16 %v493
          %v526 = vunpack.c.l.b16 %v494
          %v527 = vunpack.c.l.b16 %v495
          %v528 = vunpack.c.l.b16 %v496
          %v529 = vunpack.c.l.b16 %v497
          %v530 = vunpack.c.l.b16 %v498
          %v531 = vunpack.c.l.b16 %v499
          %v532 = vunpack.c.l.b16 %v500
          %v533 = vunpack.c.l.b16 %v501
          %v534 = vunpack.c.l.b16 %v502
          %v535 = vunpack.c.l.b16 %v503
          %v536 = vunpack.c.l.b16 %v504
          %v537 = vunpack.c.l.b16 %v505
          %v538 = vunpack.c.l.b16 %v506
          %v539 = vpack.c.b16 %v524, %v523
          %v540 = vpack.c.b16 %v526, %v525
          %v541 = vpack.c.b16 %v528, %v527
          %v542 = vpack.c.b16 %v530, %v529
          %v543 = vpack.c.b16 %v532, %v531
          %v544 = vpack.c.b16 %v534, %v533
          %v545 = vpack.c.b16 %v536, %v535
          %v546 = vpack.c.b16 %v538, %v537
          %555 = vmatprep.subr.bf16.mxu0 0
          %556 = vmatpush1.bf16.msra.mxu0 %v546
          %557 = vmatprep.subr.bf16.mxu0 0
          %558 = vmatpush1.bf16.msra.mxu0 %v545
          %559 = vmatprep.subr.bf16.mxu0 0
          %560 = vmatpush1.bf16.msra.mxu0 %v544
          %561 = vmatprep.subr.bf16.mxu0 0
          %562 = vmatpush1.bf16.msra.mxu0 %v543
          %563 = vmatprep.subr.bf16.mxu0 0
          %564 = vmatpush1.bf16.msra.mxu0 %v542
          %565 = vmatprep.subr.bf16.mxu0 0
          %566 = vmatpush1.bf16.msra.mxu0 %v541
          %567 = vmatprep.subr.bf16.mxu0 0
          %568 = vmatpush1.bf16.msra.mxu0 %v540
          %569 = vmatprep.subr.bf16.mxu0 0
          %570 = vmatpush1.bf16.msra.mxu0 %v539
          %571 = vmatprep.subr.bf16.mxu0 0
          %572 = vmatpush2.bf16.msra.mxu0 0
          %573 = vmatprep.subr.bf16.mxu0 0
          %574 = vmatpush2.bf16.msra.mxu0 0
          %575 = vmatprep.subr.bf16.mxu0 0
          %576 = vmatpush2.bf16.msra.mxu0 0
          %577 = vmatprep.subr.bf16.mxu0 0
          %578 = vmatpush2.bf16.msra.mxu0 0
          %579 = vmatprep.subr.bf16.mxu0 0
          %580 = vmatpush2.bf16.msra.mxu0 0
          %581 = vmatprep.subr.bf16.mxu0 0
          %582 = vmatpush2.bf16.msra.mxu0 0
          %583 = vmatprep.subr.bf16.mxu0 0
          %584 = vmatpush2.bf16.msra.mxu0 0
          %585 = vmatprep.subr.bf16.mxu0 0
          %586 = vmatpush2.bf16.msra.mxu0 0
          %587 = vmatprep.mubr.bf16.mxu0 0
          %588 = vmatmul.mubr.bf16.gmra.mxu0 %v487
          %v589 = vpop.f32.mrf.mxu0
          %v590 = vadd.f32 0.0, %v589
          %v591 = vpop.f32.mrf.mxu0
          %v592 = vpop.f32.mrf.mxu0
          %v593 = vadd.f32 0.0, %v592
          %v594 = vpop.f32.mrf.mxu0
          %595 = vmatprep.mubr.bf16.mxu0 0
          %596 = vmatmul.mubr.bf16.gmra.mxu0 %v488
          %v597 = vpop.f32.mrf.mxu0
          %v598 = vadd.f32 0.0, %v597
          %v599 = vpop.f32.mrf.mxu0
          %v600 = vpop.f32.mrf.mxu0
          %v601 = vadd.f32 0.0, %v600
          %v602 = vpop.f32.mrf.mxu0
          %603 = vmatprep.mubr.bf16.mxu0 0
          %604 = vmatmul.mubr.bf16.gmra.mxu0 %v489
          %v605 = vpop.f32.mrf.mxu0
          %v606 = vadd.f32 0.0, %v605
          %v607 = vpop.f32.mrf.mxu0
          %v608 = vpop.f32.mrf.mxu0
          %v609 = vadd.f32 0.0, %v608
          %v610 = vpop.f32.mrf.mxu0
          %611 = vmatprep.mubr.bf16.mxu0 0
          %612 = vmatmul.mubr.bf16.gmra.mxu0 %v490
          %v613 = vpop.f32.mrf.mxu0
          %v614 = vadd.f32 0.0, %v613
          %v615 = vpop.f32.mrf.mxu0
          %v616 = vpop.f32.mrf.mxu0
          %v617 = vadd.f32 0.0, %v616
          %v618 = vpop.f32.mrf.mxu0
          %619 = vdwg.mxu0
          %620 = vst [vmem:[#allocation2] sm:$0xff] %v590
          %621 = vst [vmem:[#allocation2 + $0x8] sm:$0xff] %v593
          %622 = vst [vmem:[#allocation2 + $0x10] sm:$0xff] %v598
          %623 = vst [vmem:[#allocation2 + $0x18] sm:$0xff] %v601
          %624 = vst [vmem:[#allocation2 + $0x20] sm:$0xff] %v606
          %625 = vst [vmem:[#allocation2 + $0x28] sm:$0xff] %v609
          %626 = vst [vmem:[#allocation2 + $0x30] sm:$0xff] %v614
          %627 = vst [vmem:[#allocation2 + $0x38] sm:$0xff] %v617
        $region76: #{lstm_op_forward.1} parent=55 // pred_fallthru
          _
        %v628 = vld [vmem:[#allocation2] sm:$0xff]
        %v629 = vld [vmem:[#allocation2 + $0x8] sm:$0xff]
        %v630 = vld [vmem:[#allocation2 + $0x10] sm:$0xff]
        %v631 = vld [vmem:[#allocation2 + $0x18] sm:$0xff]
        %v632 = vld [vmem:[#allocation2 + $0x20] sm:$0xff]
        %v633 = vld [vmem:[#allocation2 + $0x28] sm:$0xff]
        %v634 = vld [vmem:[#allocation2 + $0x30] sm:$0xff]
        %v635 = vld [vmem:[#allocation2 + $0x38] sm:$0xff]
        %v636 = vpack.c.bf16 %v629, %v628
        %v637 = vpack.c.bf16 %v631, %v630
        %v638 = vpack.c.bf16 %v633, %v632
        %v639 = vpack.c.bf16 %v635, %v634
        %v640 = vld [vmem:[%s364] sm:$0xff]
        %v641 = vld [vmem:[%s364 + $0x8] sm:$0xff]
        %v642 = vld [vmem:[%s364 + $0x10] sm:$0xff]
        %v643 = vld [vmem:[%s364 + $0x18] sm:$0xff]
        %v644 = vld [vmem:[%s364 + $0x20] sm:$0xff]
        %v645 = vld [vmem:[%s364 + $0x28] sm:$0xff]
        %v646 = vld [vmem:[%s364 + $0x30] sm:$0xff]
        %v647 = vld [vmem:[%s364 + $0x38] sm:$0xff]
        %v648 = vld [vmem:[%s364 + $0x40] sm:$0xff]
        %v649 = vld [vmem:[%s364 + $0x48] sm:$0xff]
        %v650 = vld [vmem:[%s364 + $0x50] sm:$0xff]
        %v651 = vld [vmem:[%s364 + $0x58] sm:$0xff]
        %v652 = vld [vmem:[%s364 + $0x60] sm:$0xff]
        %v653 = vld [vmem:[%s364 + $0x68] sm:$0xff]
        %v654 = vld [vmem:[%s364 + $0x70] sm:$0xff]
        %v655 = vld [vmem:[%s364 + $0x78] sm:$0xff]
        %v656 = vld [vmem:[%s364 + $0x80] sm:$0xff]
        %v657 = vld [vmem:[%s364 + $0x88] sm:$0xff]
        %v658 = vld [vmem:[%s364 + $0x90] sm:$0xff]
        %v659 = vld [vmem:[%s364 + $0x98] sm:$0xff]
        %v660 = vld [vmem:[%s364 + $0xa0] sm:$0xff]
        %v661 = vld [vmem:[%s364 + $0xa8] sm:$0xff]
        %v662 = vld [vmem:[%s364 + $0xb0] sm:$0xff]
        %v663 = vld [vmem:[%s364 + $0xb8] sm:$0xff]
        %v664 = vld [vmem:[%s364 + $0xc0] sm:$0xff]
        %v665 = vld [vmem:[%s364 + $0xc8] sm:$0xff]
        %v666 = vld [vmem:[%s364 + $0xd0] sm:$0xff]
        %v667 = vld [vmem:[%s364 + $0xd8] sm:$0xff]
        %v668 = vld [vmem:[%s364 + $0xe0] sm:$0xff]
        %v669 = vld [vmem:[%s364 + $0xe8] sm:$0xff]
        %v670 = vld [vmem:[%s364 + $0xf0] sm:$0xff]
        %v671 = vld [vmem:[%s364 + $0xf8] sm:$0xff]
        %v672 = vld [vmem:[%s423] sm:$0xf]
        %v674 = vlaneseq
        %v675 = vshrl.u32 %v674, 7
        %v676 = vsub.s32 0, %v675
        %v677 = vrot.slane %v672, %v676
        %v678 = vlaneseq
        %v679 = vshrl.u32 %v678, 7
        %v680 = vsub.s32 1, %v679
        %v681 = vrot.slane %v672, %v680
        %v682 = vlaneseq
        %v683 = vshrl.u32 %v682, 7
        %v684 = vsub.s32 2, %v683
        %v685 = vrot.slane %v672, %v684
        %v686 = vlaneseq
        %v687 = vshrl.u32 %v686, 7
        %v688 = vsub.s32 3, %v687
        %v689 = vrot.slane %v672, %v688
        %v726 = vunpack.c.l.b16 %v640
        %v727 = vunpack.c.h.b16 %v640
        %v728 = vunpack.c.l.b16 %v641
        %v729 = vunpack.c.h.b16 %v641
        %v730 = vunpack.c.l.b16 %v642
        %v731 = vunpack.c.h.b16 %v642
        %v732 = vunpack.c.l.b16 %v643
        %v733 = vunpack.c.h.b16 %v643
        %v734 = vunpack.c.l.b16 %v644
        %v735 = vunpack.c.h.b16 %v644
        %v736 = vunpack.c.l.b16 %v645
        %v737 = vunpack.c.h.b16 %v645
        %v738 = vunpack.c.l.b16 %v646
        %v739 = vunpack.c.h.b16 %v646
        %v740 = vunpack.c.l.b16 %v647
        %v741 = vunpack.c.h.b16 %v647
        %v742 = vunpack.c.l.b16 %v648
        %v743 = vunpack.c.h.b16 %v648
        %v744 = vunpack.c.l.b16 %v649
        %v745 = vunpack.c.h.b16 %v649
        %v746 = vunpack.c.l.b16 %v650
        %v747 = vunpack.c.h.b16 %v650
        %v748 = vunpack.c.l.b16 %v651
        %v749 = vunpack.c.h.b16 %v651
        %v750 = vunpack.c.l.b16 %v652
        %v751 = vunpack.c.h.b16 %v652
        %v752 = vunpack.c.l.b16 %v653
        %v753 = vunpack.c.h.b16 %v653
        %v754 = vunpack.c.l.b16 %v654
        %v755 = vunpack.c.h.b16 %v654
        %v756 = vunpack.c.l.b16 %v655
        %v757 = vunpack.c.h.b16 %v655
        %v758 = vunpack.c.l.b16 %v656
        %v759 = vunpack.c.h.b16 %v656
        %v760 = vunpack.c.l.b16 %v657
        %v761 = vunpack.c.h.b16 %v657
        %v762 = vunpack.c.l.b16 %v658
        %v763 = vunpack.c.h.b16 %v658
        %v764 = vunpack.c.l.b16 %v659
        %v765 = vunpack.c.h.b16 %v659
        %v766 = vunpack.c.l.b16 %v660
        %v767 = vunpack.c.h.b16 %v660
        %v768 = vunpack.c.l.b16 %v661
        %v769 = vunpack.c.h.b16 %v661
        %v770 = vunpack.c.l.b16 %v662
        %v771 = vunpack.c.h.b16 %v662
        %v772 = vunpack.c.l.b16 %v663
        %v773 = vunpack.c.h.b16 %v663
        %v774 = vunpack.c.l.b16 %v664
        %v775 = vunpack.c.h.b16 %v664
        %v776 = vunpack.c.l.b16 %v665
        %v777 = vunpack.c.h.b16 %v665
        %v778 = vunpack.c.l.b16 %v666
        %v779 = vunpack.c.h.b16 %v666
        %v780 = vunpack.c.l.b16 %v667
        %v781 = vunpack.c.h.b16 %v667
        %v782 = vunpack.c.l.b16 %v668
        %v783 = vunpack.c.h.b16 %v668
        %v784 = vunpack.c.l.b16 %v669
        %v785 = vunpack.c.h.b16 %v669
        %v786 = vunpack.c.l.b16 %v670
        %v787 = vunpack.c.h.b16 %v670
        %v788 = vunpack.c.l.b16 %v671
        %v789 = vunpack.c.h.b16 %v671
        %v790 = vpack.c.b16 %v730, %v726
        %v791 = vpack.c.b16 %v731, %v727
        %v792 = vpack.c.b16 %v732, %v728
        %v793 = vpack.c.b16 %v733, %v729
        %v794 = vpack.c.b16 %v738, %v734
        %v795 = vpack.c.b16 %v739, %v735
        %v796 = vpack.c.b16 %v740, %v736
        %v797 = vpack.c.b16 %v741, %v737
        %v798 = vpack.c.b16 %v746, %v742
        %v799 = vpack.c.b16 %v747, %v743
        %v800 = vpack.c.b16 %v748, %v744
        %v801 = vpack.c.b16 %v749, %v745
        %v802 = vpack.c.b16 %v754, %v750
        %v803 = vpack.c.b16 %v755, %v751
        %v804 = vpack.c.b16 %v756, %v752
        %v805 = vpack.c.b16 %v757, %v753
        %v806 = vpack.c.b16 %v762, %v758
        %v807 = vpack.c.b16 %v763, %v759
        %v808 = vpack.c.b16 %v764, %v760
        %v809 = vpack.c.b16 %v765, %v761
        %v810 = vpack.c.b16 %v770, %v766
        %v811 = vpack.c.b16 %v771, %v767
        %v812 = vpack.c.b16 %v772, %v768
        %v813 = vpack.c.b16 %v773, %v769
        %v814 = vpack.c.b16 %v778, %v774
        %v815 = vpack.c.b16 %v779, %v775
        %v816 = vpack.c.b16 %v780, %v776
        %v817 = vpack.c.b16 %v781, %v777
        %v818 = vpack.c.b16 %v786, %v782
        %v819 = vpack.c.b16 %v787, %v783
        %v820 = vpack.c.b16 %v788, %v784
        %v821 = vpack.c.b16 %v789, %v785
        %854 = vmatprep.subr.bf16.mxu0 %v819
        %855 = vmatpush1.bf16.msra.mxu0 %v818
        %856 = vmatprep.subr.bf16.mxu0 %v815
        %857 = vmatpush1.bf16.msra.mxu0 %v814
        %858 = vmatprep.subr.bf16.mxu0 %v811
        %859 = vmatpush1.bf16.msra.mxu0 %v810
        %860 = vmatprep.subr.bf16.mxu0 %v807
        %861 = vmatpush1.bf16.msra.mxu0 %v806
        %862 = vmatprep.subr.bf16.mxu0 %v803
        %863 = vmatpush1.bf16.msra.mxu0 %v802
        %864 = vmatprep.subr.bf16.mxu0 %v799
        %865 = vmatpush1.bf16.msra.mxu0 %v798
        %866 = vmatprep.subr.bf16.mxu0 %v795
        %867 = vmatpush1.bf16.msra.mxu0 %v794
        %868 = vmatprep.subr.bf16.mxu0 %v791
        %869 = vmatpush1.bf16.msra.mxu0 %v790
        %870 = vmatprep.subr.bf16.mxu0 0
        %871 = vmatpush2.bf16.msra.mxu0 0
        %872 = vmatprep.subr.bf16.mxu0 0
        %873 = vmatpush2.bf16.msra.mxu0 0
        %874 = vmatprep.subr.bf16.mxu0 0
        %875 = vmatpush2.bf16.msra.mxu0 0
        %876 = vmatprep.subr.bf16.mxu0 0
        %877 = vmatpush2.bf16.msra.mxu0 0
        %878 = vmatprep.subr.bf16.mxu0 0
        %879 = vmatpush2.bf16.msra.mxu0 0
        %880 = vmatprep.subr.bf16.mxu0 0
        %881 = vmatpush2.bf16.msra.mxu0 0
        %882 = vmatprep.subr.bf16.mxu0 0
        %883 = vmatpush2.bf16.msra.mxu0 0
        %884 = vmatprep.subr.bf16.mxu0 0
        %885 = vmatpush2.bf16.msra.mxu0 0
        %886 = vmatprep.mubr.bf16.mxu0 0
        %887 = vmatmul.mubr.bf16.gmra.mxu0 %v636
        %v888 = vpop.f32.mrf.mxu0
        %v889 = vadd.f32 %v677, %v888
        %v890 = vpop.f32.mrf.mxu0
        %v891 = vadd.f32 %v681, %v890
        %v892 = vpop.f32.mrf.mxu0
        %v893 = vadd.f32 %v677, %v892
        %v894 = vpop.f32.mrf.mxu0
        %v895 = vadd.f32 %v681, %v894
        %896 = vmatprep.mubr.bf16.mxu0 0
        %897 = vmatmul.mubr.bf16.gmra.mxu0 %v637
        %v898 = vpop.f32.mrf.mxu0
        %v899 = vadd.f32 %v677, %v898
        %v900 = vpop.f32.mrf.mxu0
        %v901 = vadd.f32 %v681, %v900
        %v902 = vpop.f32.mrf.mxu0
        %v903 = vadd.f32 %v677, %v902
        %v904 = vpop.f32.mrf.mxu0
        %v905 = vadd.f32 %v681, %v904
        %906 = vmatprep.mubr.bf16.mxu0 0
        %907 = vmatmul.mubr.bf16.gmra.mxu0 %v638
        %v908 = vpop.f32.mrf.mxu0
        %v909 = vadd.f32 %v677, %v908
        %v910 = vpop.f32.mrf.mxu0
        %v911 = vadd.f32 %v681, %v910
        %v912 = vpop.f32.mrf.mxu0
        %v913 = vadd.f32 %v677, %v912
        %v914 = vpop.f32.mrf.mxu0
        %v915 = vadd.f32 %v681, %v914
        %916 = vmatprep.mubr.bf16.mxu0 0
        %917 = vmatmul.mubr.bf16.gmra.mxu0 %v639
        %v918 = vpop.f32.mrf.mxu0
        %v919 = vadd.f32 %v677, %v918
        %v920 = vpop.f32.mrf.mxu0
        %v921 = vadd.f32 %v681, %v920
        %v922 = vpop.f32.mrf.mxu0
        %v923 = vadd.f32 %v677, %v922
        %v924 = vpop.f32.mrf.mxu0
        %v925 = vadd.f32 %v681, %v924
        %926 = vdwg.mxu0
        %927 = vmatprep.subr.bf16.mxu0 %v821
        %928 = vmatpush1.bf16.msra.mxu0 %v820
        %929 = vmatprep.subr.bf16.mxu0 %v817
        %930 = vmatpush1.bf16.msra.mxu0 %v816
        %931 = vmatprep.subr.bf16.mxu0 %v813
        %932 = vmatpush1.bf16.msra.mxu0 %v812
        %933 = vmatprep.subr.bf16.mxu0 %v809
        %934 = vmatpush1.bf16.msra.mxu0 %v808
        %935 = vmatprep.subr.bf16.mxu0 %v805
        %936 = vmatpush1.bf16.msra.mxu0 %v804
        %937 = vmatprep.subr.bf16.mxu0 %v801
        %938 = vmatpush1.bf16.msra.mxu0 %v800
        %939 = vmatprep.subr.bf16.mxu0 %v797
        %940 = vmatpush1.bf16.msra.mxu0 %v796
        %941 = vmatprep.subr.bf16.mxu0 %v793
        %942 = vmatpush1.bf16.msra.mxu0 %v792
        %943 = vmatprep.subr.bf16.mxu0 0
        %944 = vmatpush2.bf16.msra.mxu0 0
        %945 = vmatprep.subr.bf16.mxu0 0
        %946 = vmatpush2.bf16.msra.mxu0 0
        %947 = vmatprep.subr.bf16.mxu0 0
        %948 = vmatpush2.bf16.msra.mxu0 0
        %949 = vmatprep.subr.bf16.mxu0 0
        %950 = vmatpush2.bf16.msra.mxu0 0
        %951 = vmatprep.subr.bf16.mxu0 0
        %952 = vmatpush2.bf16.msra.mxu0 0
        %953 = vmatprep.subr.bf16.mxu0 0
        %954 = vmatpush2.bf16.msra.mxu0 0
        %955 = vmatprep.subr.bf16.mxu0 0
        %956 = vmatpush2.bf16.msra.mxu0 0
        %957 = vmatprep.subr.bf16.mxu0 0
        %958 = vmatpush2.bf16.msra.mxu0 0
        %959 = vmatprep.mubr.bf16.mxu0 0
        %960 = vmatmul.mubr.bf16.gmra.mxu0 %v636
        %v961 = vpop.f32.mrf.mxu0
        %v962 = vadd.f32 %v685, %v961
        %v963 = vpop.f32.mrf.mxu0
        %v964 = vadd.f32 %v689, %v963
        %v965 = vpop.f32.mrf.mxu0
        %v966 = vadd.f32 %v685, %v965
        %v967 = vpop.f32.mrf.mxu0
        %v968 = vadd.f32 %v689, %v967
        %969 = vmatprep.mubr.bf16.mxu0 0
        %970 = vmatmul.mubr.bf16.gmra.mxu0 %v637
        %v971 = vpop.f32.mrf.mxu0
        %v972 = vadd.f32 %v685, %v971
        %v973 = vpop.f32.mrf.mxu0
        %v974 = vadd.f32 %v689, %v973
        %v975 = vpop.f32.mrf.mxu0
        %v976 = vadd.f32 %v685, %v975
        %v977 = vpop.f32.mrf.mxu0
        %v978 = vadd.f32 %v689, %v977
        %979 = vmatprep.mubr.bf16.mxu0 0
        %980 = vmatmul.mubr.bf16.gmra.mxu0 %v638
        %v981 = vpop.f32.mrf.mxu0
        %v982 = vadd.f32 %v685, %v981
        %v983 = vpop.f32.mrf.mxu0
        %v984 = vadd.f32 %v689, %v983
        %v985 = vpop.f32.mrf.mxu0
        %v986 = vadd.f32 %v685, %v985
        %v987 = vpop.f32.mrf.mxu0
        %v988 = vadd.f32 %v689, %v987
        %989 = vmatprep.mubr.bf16.mxu0 0
        %990 = vmatmul.mubr.bf16.gmra.mxu0 %v639
        %v991 = vpop.f32.mrf.mxu0
        %v992 = vadd.f32 %v685, %v991
        %v993 = vpop.f32.mrf.mxu0
        %v994 = vadd.f32 %v689, %v993
        %v995 = vpop.f32.mrf.mxu0
        %v996 = vadd.f32 %v685, %v995
        %v997 = vpop.f32.mrf.mxu0
        %v998 = vadd.f32 %v689, %v997
        %999 = vdwg.mxu0
        %1000 = vst [vmem:[#allocation3] sm:$0xff] %v889
        %1001 = vst [vmem:[#allocation3 + $0x8] sm:$0xff] %v891
        %1002 = vst [vmem:[#allocation3 + $0x10] sm:$0xff] %v962
        %1003 = vst [vmem:[#allocation3 + $0x18] sm:$0xff] %v964
        %1004 = vst [vmem:[#allocation3 + $0x20] sm:$0xff] %v893
        %1005 = vst [vmem:[#allocation3 + $0x28] sm:$0xff] %v895
        %1006 = vst [vmem:[#allocation3 + $0x30] sm:$0xff] %v966
        %1007 = vst [vmem:[#allocation3 + $0x38] sm:$0xff] %v968
        %1008 = vst [vmem:[#allocation3 + $0x40] sm:$0xff] %v899
        %1009 = vst [vmem:[#allocation3 + $0x48] sm:$0xff] %v901
        %1010 = vst [vmem:[#allocation3 + $0x50] sm:$0xff] %v972
        %1011 = vst [vmem:[#allocation3 + $0x58] sm:$0xff] %v974
        %1012 = vst [vmem:[#allocation3 + $0x60] sm:$0xff] %v903
        %1013 = vst [vmem:[#allocation3 + $0x68] sm:$0xff] %v905
        %1014 = vst [vmem:[#allocation3 + $0x70] sm:$0xff] %v976
        %1015 = vst [vmem:[#allocation3 + $0x78] sm:$0xff] %v978
        %1016 = vst [vmem:[#allocation3 + $0x80] sm:$0xff] %v909
        %1017 = vst [vmem:[#allocation3 + $0x88] sm:$0xff] %v911
        %1018 = vst [vmem:[#allocation3 + $0x90] sm:$0xff] %v982
        %1019 = vst [vmem:[#allocation3 + $0x98] sm:$0xff] %v984
        %1020 = vst [vmem:[#allocation3 + $0xa0] sm:$0xff] %v913
        %1021 = vst [vmem:[#allocation3 + $0xa8] sm:$0xff] %v915
        %1022 = vst [vmem:[#allocation3 + $0xb0] sm:$0xff] %v986
        %1023 = vst [vmem:[#allocation3 + $0xb8] sm:$0xff] %v988
        %1024 = vst [vmem:[#allocation3 + $0xc0] sm:$0xff] %v919
        %1025 = vst [vmem:[#allocation3 + $0xc8] sm:$0xff] %v921
        %1026 = vst [vmem:[#allocation3 + $0xd0] sm:$0xff] %v992
        %1027 = vst [vmem:[#allocation3 + $0xd8] sm:$0xff] %v994
        %1028 = vst [vmem:[#allocation3 + $0xe0] sm:$0xff] %v923
        %1029 = vst [vmem:[#allocation3 + $0xe8] sm:$0xff] %v925
        %1030 = vst [vmem:[#allocation3 + $0xf0] sm:$0xff] %v996
        %1031 = vst [vmem:[#allocation3 + $0xf8] sm:$0xff] %v998
        %v1032 = vld [vmem:[%s373] sm:$0xff]
        %v1033 = vld [vmem:[%s373 + $0x8] sm:$0xff]
        %v1034 = vld [vmem:[%s373 + $0x10] sm:$0xff]
        %v1035 = vld [vmem:[%s373 + $0x18] sm:$0xff]
        %v1036 = vld [vmem:[%s373 + $0x20] sm:$0xff]
        %v1037 = vld [vmem:[%s373 + $0x28] sm:$0xff]
        %v1038 = vld [vmem:[%s373 + $0x30] sm:$0xff]
        %v1039 = vld [vmem:[%s373 + $0x38] sm:$0xff]
        %v1040 = vld [vmem:[%s373 + $0x40] sm:$0xff]
        %v1041 = vld [vmem:[%s373 + $0x48] sm:$0xff]
        %v1042 = vld [vmem:[%s373 + $0x50] sm:$0xff]
        %v1043 = vld [vmem:[%s373 + $0x58] sm:$0xff]
        %v1044 = vld [vmem:[%s373 + $0x60] sm:$0xff]
        %v1045 = vld [vmem:[%s373 + $0x68] sm:$0xff]
        %v1046 = vld [vmem:[%s373 + $0x70] sm:$0xff]
        %v1047 = vld [vmem:[%s373 + $0x78] sm:$0xff]
        %v1048 = vld [vmem:[%s373 + $0x80] sm:$0xff]
        %v1049 = vld [vmem:[%s373 + $0x88] sm:$0xff]
        %v1050 = vld [vmem:[%s373 + $0x90] sm:$0xff]
        %v1051 = vld [vmem:[%s373 + $0x98] sm:$0xff]
        %v1052 = vld [vmem:[%s373 + $0xa0] sm:$0xff]
        %v1053 = vld [vmem:[%s373 + $0xa8] sm:$0xff]
        %v1054 = vld [vmem:[%s373 + $0xb0] sm:$0xff]
        %v1055 = vld [vmem:[%s373 + $0xb8] sm:$0xff]
        %v1056 = vld [vmem:[%s373 + $0xc0] sm:$0xff]
        %v1057 = vld [vmem:[%s373 + $0xc8] sm:$0xff]
        %v1058 = vld [vmem:[%s373 + $0xd0] sm:$0xff]
        %v1059 = vld [vmem:[%s373 + $0xd8] sm:$0xff]
        %v1060 = vld [vmem:[%s373 + $0xe0] sm:$0xff]
        %v1061 = vld [vmem:[%s373 + $0xe8] sm:$0xff]
        %v1062 = vld [vmem:[%s373 + $0xf0] sm:$0xff]
        %v1063 = vld [vmem:[%s373 + $0xf8] sm:$0xff]
        %v1064 = vld [vmem:[#allocation3] sm:$0xff]
        %v1065 = vld [vmem:[#allocation3 + $0x8] sm:$0xff]
        %v1066 = vld [vmem:[#allocation3 + $0x10] sm:$0xff]
        %v1067 = vld [vmem:[#allocation3 + $0x18] sm:$0xff]
        %v1100 = vunpack.c.l.b16 %v1032
        %v1101 = vunpack.c.h.b16 %v1032
        %v1102 = vunpack.c.l.b16 %v1033
        %v1103 = vunpack.c.h.b16 %v1033
        %v1104 = vunpack.c.l.b16 %v1034
        %v1105 = vunpack.c.h.b16 %v1034
        %v1106 = vunpack.c.l.b16 %v1035
        %v1107 = vunpack.c.h.b16 %v1035
        %v1108 = vunpack.c.l.b16 %v1036
        %v1109 = vunpack.c.h.b16 %v1036
        %v1110 = vunpack.c.l.b16 %v1037
        %v1111 = vunpack.c.h.b16 %v1037
        %v1112 = vunpack.c.l.b16 %v1038
        %v1113 = vunpack.c.h.b16 %v1038
        %v1114 = vunpack.c.l.b16 %v1039
        %v1115 = vunpack.c.h.b16 %v1039
        %v1116 = vunpack.c.l.b16 %v1040
        %v1117 = vunpack.c.h.b16 %v1040
        %v1118 = vunpack.c.l.b16 %v1041
        %v1119 = vunpack.c.h.b16 %v1041
        %v1120 = vunpack.c.l.b16 %v1042
        %v1121 = vunpack.c.h.b16 %v1042
        %v1122 = vunpack.c.l.b16 %v1043
        %v1123 = vunpack.c.h.b16 %v1043
        %v1124 = vunpack.c.l.b16 %v1044
        %v1125 = vunpack.c.h.b16 %v1044
        %v1126 = vunpack.c.l.b16 %v1045
        %v1127 = vunpack.c.h.b16 %v1045
        %v1128 = vunpack.c.l.b16 %v1046
        %v1129 = vunpack.c.h.b16 %v1046
        %v1130 = vunpack.c.l.b16 %v1047
        %v1131 = vunpack.c.h.b16 %v1047
        %v1132 = vunpack.c.l.b16 %v1048
        %v1133 = vunpack.c.h.b16 %v1048
        %v1134 = vunpack.c.l.b16 %v1049
        %v1135 = vunpack.c.h.b16 %v1049
        %v1136 = vunpack.c.l.b16 %v1050
        %v1137 = vunpack.c.h.b16 %v1050
        %v1138 = vunpack.c.l.b16 %v1051
        %v1139 = vunpack.c.h.b16 %v1051
        %v1140 = vunpack.c.l.b16 %v1052
        %v1141 = vunpack.c.h.b16 %v1052
        %v1142 = vunpack.c.l.b16 %v1053
        %v1143 = vunpack.c.h.b16 %v1053
        %v1144 = vunpack.c.l.b16 %v1054
        %v1145 = vunpack.c.h.b16 %v1054
        %v1146 = vunpack.c.l.b16 %v1055
        %v1147 = vunpack.c.h.b16 %v1055
        %v1148 = vunpack.c.l.b16 %v1056
        %v1149 = vunpack.c.h.b16 %v1056
        %v1150 = vunpack.c.l.b16 %v1057
        %v1151 = vunpack.c.h.b16 %v1057
        %v1152 = vunpack.c.l.b16 %v1058
        %v1153 = vunpack.c.h.b16 %v1058
        %v1154 = vunpack.c.l.b16 %v1059
        %v1155 = vunpack.c.h.b16 %v1059
        %v1156 = vunpack.c.l.b16 %v1060
        %v1157 = vunpack.c.h.b16 %v1060
        %v1158 = vunpack.c.l.b16 %v1061
        %v1159 = vunpack.c.h.b16 %v1061
        %v1160 = vunpack.c.l.b16 %v1062
        %v1161 = vunpack.c.h.b16 %v1062
        %v1162 = vunpack.c.l.b16 %v1063
        %v1163 = vunpack.c.h.b16 %v1063
        %v1164 = vpack.c.b16 %v1104, %v1100
        %v1165 = vpack.c.b16 %v1105, %v1101
        %v1166 = vpack.c.b16 %v1106, %v1102
        %v1167 = vpack.c.b16 %v1107, %v1103
        %v1168 = vpack.c.b16 %v1112, %v1108
        %v1169 = vpack.c.b16 %v1113, %v1109
        %v1170 = vpack.c.b16 %v1114, %v1110
        %v1171 = vpack.c.b16 %v1115, %v1111
        %v1172 = vpack.c.b16 %v1120, %v1116
        %v1173 = vpack.c.b16 %v1121, %v1117
        %v1174 = vpack.c.b16 %v1122, %v1118
        %v1175 = vpack.c.b16 %v1123, %v1119
        %v1176 = vpack.c.b16 %v1128, %v1124
        %v1177 = vpack.c.b16 %v1129, %v1125
        %v1178 = vpack.c.b16 %v1130, %v1126
        %v1179 = vpack.c.b16 %v1131, %v1127
        %v1180 = vpack.c.b16 %v1136, %v1132
        %v1181 = vpack.c.b16 %v1137, %v1133
        %v1182 = vpack.c.b16 %v1138, %v1134
        %v1183 = vpack.c.b16 %v1139, %v1135
        %v1184 = vpack.c.b16 %v1144, %v1140
        %v1185 = vpack.c.b16 %v1145, %v1141
        %v1186 = vpack.c.b16 %v1146, %v1142
        %v1187 = vpack.c.b16 %v1147, %v1143
        %v1188 = vpack.c.b16 %v1152, %v1148
        %v1189 = vpack.c.b16 %v1153, %v1149
        %v1190 = vpack.c.b16 %v1154, %v1150
        %v1191 = vpack.c.b16 %v1155, %v1151
        %v1192 = vpack.c.b16 %v1160, %v1156
        %v1193 = vpack.c.b16 %v1161, %v1157
        %v1194 = vpack.c.b16 %v1162, %v1158
        %v1195 = vpack.c.b16 %v1163, %v1159
        %1228 = vmatprep.subr.bf16.mxu0 %v1193
        %1229 = vmatpush1.bf16.msra.mxu0 %v1192
        %1230 = vmatprep.subr.bf16.mxu0 %v1189
        %1231 = vmatpush1.bf16.msra.mxu0 %v1188
        %1232 = vmatprep.subr.bf16.mxu0 %v1185
        %1233 = vmatpush1.bf16.msra.mxu0 %v1184
        %1234 = vmatprep.subr.bf16.mxu0 %v1181
        %1235 = vmatpush1.bf16.msra.mxu0 %v1180
        %1236 = vmatprep.subr.bf16.mxu0 %v1177
        %1237 = vmatpush1.bf16.msra.mxu0 %v1176
        %1238 = vmatprep.subr.bf16.mxu0 %v1173
        %1239 = vmatpush1.bf16.msra.mxu0 %v1172
        %1240 = vmatprep.subr.bf16.mxu0 %v1169
        %1241 = vmatpush1.bf16.msra.mxu0 %v1168
        %1242 = vmatprep.subr.bf16.mxu0 %v1165
        %1243 = vmatpush1.bf16.msra.mxu0 %v1164
        %1244 = vmatprep.subr.bf16.mxu0 0
        %1245 = vmatpush2.bf16.msra.mxu0 0
        %1246 = vmatprep.subr.bf16.mxu0 0
        %1247 = vmatpush2.bf16.msra.mxu0 0
        %1248 = vmatprep.subr.bf16.mxu0 0
        %1249 = vmatpush2.bf16.msra.mxu0 0
        %1250 = vmatprep.subr.bf16.mxu0 0
        %1251 = vmatpush2.bf16.msra.mxu0 0
        %1252 = vmatprep.subr.bf16.mxu0 0
        %1253 = vmatpush2.bf16.msra.mxu0 0
        %1254 = vmatprep.subr.bf16.mxu0 0
        %1255 = vmatpush2.bf16.msra.mxu0 0
        %1256 = vmatprep.subr.bf16.mxu0 0
        %1257 = vmatpush2.bf16.msra.mxu0 0
        %1258 = vmatprep.subr.bf16.mxu0 0
        %1259 = vmatpush2.bf16.msra.mxu0 0
        %1260 = vmatprep.mubr.bf16.mxu0 0
        %1261 = vmatmul.mubr.bf16.gmra.mxu0 0
        %v1262 = vpop.f32.mrf.mxu0
        %v1263 = vadd.f32 0.0, %v1262
        %v1264 = vpop.f32.mrf.mxu0
        %v1265 = vadd.f32 0.0, %v1264
        %v1266 = vpop.f32.mrf.mxu0
        %v1267 = vpop.f32.mrf.mxu0
        %1268 = vdwg.mxu0
        %1269 = vmatprep.subr.bf16.mxu0 %v1195
        %1270 = vmatpush1.bf16.msra.mxu0 %v1194
        %1271 = vmatprep.subr.bf16.mxu0 %v1191
        %1272 = vmatpush1.bf16.msra.mxu0 %v1190
        %1273 = vmatprep.subr.bf16.mxu0 %v1187
        %1274 = vmatpush1.bf16.msra.mxu0 %v1186
        %1275 = vmatprep.subr.bf16.mxu0 %v1183
        %1276 = vmatpush1.bf16.msra.mxu0 %v1182
        %1277 = vmatprep.subr.bf16.mxu0 %v1179
        %1278 = vmatpush1.bf16.msra.mxu0 %v1178
        %1279 = vmatprep.subr.bf16.mxu0 %v1175
        %1280 = vmatpush1.bf16.msra.mxu0 %v1174
        %1281 = vmatprep.subr.bf16.mxu0 %v1171
        %1282 = vmatpush1.bf16.msra.mxu0 %v1170
        %1283 = vmatprep.subr.bf16.mxu0 %v1167
        %1284 = vmatpush1.bf16.msra.mxu0 %v1166
        %1285 = vmatprep.subr.bf16.mxu0 0
        %1286 = vmatpush2.bf16.msra.mxu0 0
        %1287 = vmatprep.subr.bf16.mxu0 0
        %1288 = vmatpush2.bf16.msra.mxu0 0
        %1289 = vmatprep.subr.bf16.mxu0 0
        %1290 = vmatpush2.bf16.msra.mxu0 0
        %1291 = vmatprep.subr.bf16.mxu0 0
        %1292 = vmatpush2.bf16.msra.mxu0 0
        %1293 = vmatprep.subr.bf16.mxu0 0
        %1294 = vmatpush2.bf16.msra.mxu0 0
        %1295 = vmatprep.subr.bf16.mxu0 0
        %1296 = vmatpush2.bf16.msra.mxu0 0
        %1297 = vmatprep.subr.bf16.mxu0 0
        %1298 = vmatpush2.bf16.msra.mxu0 0
        %1299 = vmatprep.subr.bf16.mxu0 0
        %1300 = vmatpush2.bf16.msra.mxu0 0
        %1301 = vmatprep.mubr.bf16.mxu0 0
        %1302 = vmatmul.mubr.bf16.gmra.mxu0 0
        %v1303 = vpop.f32.mrf.mxu0
        %v1304 = vadd.f32 0.0, %v1303
        %v1305 = vpop.f32.mrf.mxu0
        %v1306 = vadd.f32 0.0, %v1305
        %v1307 = vpop.f32.mrf.mxu0
        %v1308 = vpop.f32.mrf.mxu0
        %1309 = vdwg.mxu0
        %v1310 = vadd.f32 %v1064, %v1263
        %v1311 = vadd.f32 %v1065, %v1265
        %v1312 = vadd.f32 %v1066, %v1304
        %v1313 = vadd.f32 %v1067, %v1306
        %v1314 = vxor.u32 %v1310, 2147483648
        %v1315 = vxor.u32 %v1311, 2147483648
        %v1316 = vxor.u32 %v1312, 2147483648
        %v1317 = vmul.f32 %v1314, 1.442695
        %v1318 = vpow.pop %v1317
        %v1319 = vmul.f32 %v1315, 1.442695
        %v1320 = vpow.pop %v1319
        %v1321 = vmul.f32 %v1316, 1.442695
        %v1322 = vpow.pop %v1321
        %v1323 = vadd.f32 %v1318, 1.0
        %v1324 = vadd.f32 %v1320, 1.0
        %v1325 = vadd.f32 %v1322, 1.0
        %v1326 = vrcp.pop %v1323
        %v1327 = vmul.f32 1.0, %v1326
        %v1328 = vrcp.pop %v1324
        %v1329 = vmul.f32 1.0, %v1328
        %v1330 = vrcp.pop %v1325
        %v1331 = vmul.f32 1.0, %v1330
        %v1332 = vtanh.pop %v1313
        %v1333 = vmul.f32 %v1329, 0.0
        %v1334 = vmul.f32 %v1327, %v1332
        %v1335 = vadd.f32 %v1333, %v1334
        %v1336 = vtanh.pop %v1335
        %v1337 = vmul.f32 %v1331, %v1336
        %1338 = vst [vmem:[#allocation2] sm:$0xff] %v1337
        %v1339 = vld [vmem:[#allocation3 + $0x20] sm:$0xff]
        %v1340 = vld [vmem:[#allocation3 + $0x28] sm:$0xff]
        %v1341 = vld [vmem:[#allocation3 + $0x30] sm:$0xff]
        %v1342 = vld [vmem:[#allocation3 + $0x38] sm:$0xff]
        %v1343 = vpack.c.bf16 %v1337, %v1337
        %1344 = vmatprep.subr.bf16.mxu0 %v1193
        %1345 = vmatpush1.bf16.msra.mxu0 %v1192
        %1346 = vmatprep.subr.bf16.mxu0 %v1189
        %1347 = vmatpush1.bf16.msra.mxu0 %v1188
        %1348 = vmatprep.subr.bf16.mxu0 %v1185
        %1349 = vmatpush1.bf16.msra.mxu0 %v1184
        %1350 = vmatprep.subr.bf16.mxu0 %v1181
        %1351 = vmatpush1.bf16.msra.mxu0 %v1180
        %1352 = vmatprep.subr.bf16.mxu0 %v1177
        %1353 = vmatpush1.bf16.msra.mxu0 %v1176
        %1354 = vmatprep.subr.bf16.mxu0 %v1173
        %1355 = vmatpush1.bf16.msra.mxu0 %v1172
        %1356 = vmatprep.subr.bf16.mxu0 %v1169
        %1357 = vmatpush1.bf16.msra.mxu0 %v1168
        %1358 = vmatprep.subr.bf16.mxu0 %v1165
        %1359 = vmatpush1.bf16.msra.mxu0 %v1164
        %1360 = vmatprep.subr.bf16.mxu0 0
        %1361 = vmatpush2.bf16.msra.mxu0 0
        %1362 = vmatprep.subr.bf16.mxu0 0
        %1363 = vmatpush2.bf16.msra.mxu0 0
        %1364 = vmatprep.subr.bf16.mxu0 0
        %1365 = vmatpush2.bf16.msra.mxu0 0
        %1366 = vmatprep.subr.bf16.mxu0 0
        %1367 = vmatpush2.bf16.msra.mxu0 0
        %1368 = vmatprep.subr.bf16.mxu0 0
        %1369 = vmatpush2.bf16.msra.mxu0 0
        %1370 = vmatprep.subr.bf16.mxu0 0
        %1371 = vmatpush2.bf16.msra.mxu0 0
        %1372 = vmatprep.subr.bf16.mxu0 0
        %1373 = vmatpush2.bf16.msra.mxu0 0
        %1374 = vmatprep.subr.bf16.mxu0 0
        %1375 = vmatpush2.bf16.msra.mxu0 0
        %1376 = vmatprep.mubr.bf16.mxu0 0
        %1377 = vmatmul.mubr.bf16.gmra.mxu0 %v1343
        %v1378 = vpop.f32.mrf.mxu0
        %v1379 = vadd.f32 0.0, %v1378
        %v1380 = vpop.f32.mrf.mxu0
        %v1381 = vadd.f32 0.0, %v1380
        %v1382 = vpop.f32.mrf.mxu0
        %v1383 = vpop.f32.mrf.mxu0
        %1384 = vdwg.mxu0
        %1385 = vmatprep.subr.bf16.mxu0 %v1195
        %1386 = vmatpush1.bf16.msra.mxu0 %v1194
        %1387 = vmatprep.subr.bf16.mxu0 %v1191
        %1388 = vmatpush1.bf16.msra.mxu0 %v1190
        %1389 = vmatprep.subr.bf16.mxu0 %v1187
        %1390 = vmatpush1.bf16.msra.mxu0 %v1186
        %1391 = vmatprep.subr.bf16.mxu0 %v1183
        %1392 = vmatpush1.bf16.msra.mxu0 %v1182
        %1393 = vmatprep.subr.bf16.mxu0 %v1179
        %1394 = vmatpush1.bf16.msra.mxu0 %v1178
        %1395 = vmatprep.subr.bf16.mxu0 %v1175
        %1396 = vmatpush1.bf16.msra.mxu0 %v1174
        %1397 = vmatprep.subr.bf16.mxu0 %v1171
        %1398 = vmatpush1.bf16.msra.mxu0 %v1170
        %1399 = vmatprep.subr.bf16.mxu0 %v1167
        %1400 = vmatpush1.bf16.msra.mxu0 %v1166
        %1401 = vmatprep.subr.bf16.mxu0 0
        %1402 = vmatpush2.bf16.msra.mxu0 0
        %1403 = vmatprep.subr.bf16.mxu0 0
        %1404 = vmatpush2.bf16.msra.mxu0 0
        %1405 = vmatprep.subr.bf16.mxu0 0
        %1406 = vmatpush2.bf16.msra.mxu0 0
        %1407 = vmatprep.subr.bf16.mxu0 0
        %1408 = vmatpush2.bf16.msra.mxu0 0
        %1409 = vmatprep.subr.bf16.mxu0 0
        %1410 = vmatpush2.bf16.msra.mxu0 0
        %1411 = vmatprep.subr.bf16.mxu0 0
        %1412 = vmatpush2.bf16.msra.mxu0 0
        %1413 = vmatprep.subr.bf16.mxu0 0
        %1414 = vmatpush2.bf16.msra.mxu0 0
        %1415 = vmatprep.subr.bf16.mxu0 0
        %1416 = vmatpush2.bf16.msra.mxu0 0
        %1417 = vmatprep.mubr.bf16.mxu0 0
        %1418 = vmatmul.mubr.bf16.gmra.mxu0 %v1343
        %v1419 = vpop.f32.mrf.mxu0
        %v1420 = vadd.f32 0.0, %v1419
        %v1421 = vpop.f32.mrf.mxu0
        %v1422 = vadd.f32 0.0, %v1421
        %v1423 = vpop.f32.mrf.mxu0
        %v1424 = vpop.f32.mrf.mxu0
        %1425 = vdwg.mxu0
        %v1426 = vadd.f32 %v1339, %v1379
        %v1427 = vadd.f32 %v1340, %v1381
        %v1428 = vadd.f32 %v1341, %v1420
        %v1429 = vadd.f32 %v1342, %v1422
        %v1430 = vxor.u32 %v1426, 2147483648
        %v1431 = vxor.u32 %v1427, 2147483648
        %v1432 = vxor.u32 %v1428, 2147483648
        %v1433 = vmul.f32 %v1430, 1.442695
        %v1434 = vpow.pop %v1433
        %v1435 = vmul.f32 %v1431, 1.442695
        %v1436 = vpow.pop %v1435
        %v1437 = vmul.f32 %v1432, 1.442695
        %v1438 = vpow.pop %v1437
        %v1439 = vadd.f32 %v1434, 1.0
        %v1440 = vadd.f32 %v1436, 1.0
        %v1441 = vadd.f32 %v1438, 1.0
        %v1442 = vrcp.pop %v1439
        %v1443 = vmul.f32 1.0, %v1442
        %v1444 = vrcp.pop %v1440
        %v1445 = vmul.f32 1.0, %v1444
        %v1446 = vrcp.pop %v1441
        %v1447 = vmul.f32 1.0, %v1446
        %v1448 = vtanh.pop %v1429
        %v1449 = vmul.f32 %v1445, %v1335
        %v1450 = vmul.f32 %v1443, %v1448
        %v1451 = vadd.f32 %v1449, %v1450
        %v1452 = vtanh.pop %v1451
        %v1453 = vmul.f32 %v1447, %v1452
        %1454 = vst [vmem:[#allocation2 + $0x8] sm:$0xff] %v1453
        %v1455 = vld [vmem:[#allocation3 + $0x40] sm:$0xff]
        %v1456 = vld [vmem:[#allocation3 + $0x48] sm:$0xff]
        %v1457 = vld [vmem:[#allocation3 + $0x50] sm:$0xff]
        %v1458 = vld [vmem:[#allocation3 + $0x58] sm:$0xff]
        %v1459 = vpack.c.bf16 %v1453, %v1453
        %1460 = vmatprep.subr.bf16.mxu0 %v1193
        %1461 = vmatpush1.bf16.msra.mxu0 %v1192
        %1462 = vmatprep.subr.bf16.mxu0 %v1189
        %1463 = vmatpush1.bf16.msra.mxu0 %v1188
        %1464 = vmatprep.subr.bf16.mxu0 %v1185
        %1465 = vmatpush1.bf16.msra.mxu0 %v1184
        %1466 = vmatprep.subr.bf16.mxu0 %v1181
        %1467 = vmatpush1.bf16.msra.mxu0 %v1180
        %1468 = vmatprep.subr.bf16.mxu0 %v1177
        %1469 = vmatpush1.bf16.msra.mxu0 %v1176
        %1470 = vmatprep.subr.bf16.mxu0 %v1173
        %1471 = vmatpush1.bf16.msra.mxu0 %v1172
        %1472 = vmatprep.subr.bf16.mxu0 %v1169
        %1473 = vmatpush1.bf16.msra.mxu0 %v1168
        %1474 = vmatprep.subr.bf16.mxu0 %v1165
        %1475 = vmatpush1.bf16.msra.mxu0 %v1164
        %1476 = vmatprep.subr.bf16.mxu0 0
        %1477 = vmatpush2.bf16.msra.mxu0 0
        %1478 = vmatprep.subr.bf16.mxu0 0
        %1479 = vmatpush2.bf16.msra.mxu0 0
        %1480 = vmatprep.subr.bf16.mxu0 0
        %1481 = vmatpush2.bf16.msra.mxu0 0
        %1482 = vmatprep.subr.bf16.mxu0 0
        %1483 = vmatpush2.bf16.msra.mxu0 0
        %1484 = vmatprep.subr.bf16.mxu0 0
        %1485 = vmatpush2.bf16.msra.mxu0 0
        %1486 = vmatprep.subr.bf16.mxu0 0
        %1487 = vmatpush2.bf16.msra.mxu0 0
        %1488 = vmatprep.subr.bf16.mxu0 0
        %1489 = vmatpush2.bf16.msra.mxu0 0
        %1490 = vmatprep.subr.bf16.mxu0 0
        %1491 = vmatpush2.bf16.msra.mxu0 0
        %1492 = vmatprep.mubr.bf16.mxu0 0
        %1493 = vmatmul.mubr.bf16.gmra.mxu0 %v1459
        %v1494 = vpop.f32.mrf.mxu0
        %v1495 = vadd.f32 0.0, %v1494
        %v1496 = vpop.f32.mrf.mxu0
        %v1497 = vadd.f32 0.0, %v1496
        %v1498 = vpop.f32.mrf.mxu0
        %v1499 = vpop.f32.mrf.mxu0
        %1500 = vdwg.mxu0
        %1501 = vmatprep.subr.bf16.mxu0 %v1195
        %1502 = vmatpush1.bf16.msra.mxu0 %v1194
        %1503 = vmatprep.subr.bf16.mxu0 %v1191
        %1504 = vmatpush1.bf16.msra.mxu0 %v1190
        %1505 = vmatprep.subr.bf16.mxu0 %v1187
        %1506 = vmatpush1.bf16.msra.mxu0 %v1186
        %1507 = vmatprep.subr.bf16.mxu0 %v1183
        %1508 = vmatpush1.bf16.msra.mxu0 %v1182
        %1509 = vmatprep.subr.bf16.mxu0 %v1179
        %1510 = vmatpush1.bf16.msra.mxu0 %v1178
        %1511 = vmatprep.subr.bf16.mxu0 %v1175
        %1512 = vmatpush1.bf16.msra.mxu0 %v1174
        %1513 = vmatprep.subr.bf16.mxu0 %v1171
        %1514 = vmatpush1.bf16.msra.mxu0 %v1170
        %1515 = vmatprep.subr.bf16.mxu0 %v1167
        %1516 = vmatpush1.bf16.msra.mxu0 %v1166
        %1517 = vmatprep.subr.bf16.mxu0 0
        %1518 = vmatpush2.bf16.msra.mxu0 0
        %1519 = vmatprep.subr.bf16.mxu0 0
        %1520 = vmatpush2.bf16.msra.mxu0 0
        %1521 = vmatprep.subr.bf16.mxu0 0
        %1522 = vmatpush2.bf16.msra.mxu0 0
        %1523 = vmatprep.subr.bf16.mxu0 0
        %1524 = vmatpush2.bf16.msra.mxu0 0
        %1525 = vmatprep.subr.bf16.mxu0 0
        %1526 = vmatpush2.bf16.msra.mxu0 0
        %1527 = vmatprep.subr.bf16.mxu0 0
        %1528 = vmatpush2.bf16.msra.mxu0 0
        %1529 = vmatprep.subr.bf16.mxu0 0
        %1530 = vmatpush2.bf16.msra.mxu0 0
        %1531 = vmatprep.subr.bf16.mxu0 0
        %1532 = vmatpush2.bf16.msra.mxu0 0
        %1533 = vmatprep.mubr.bf16.mxu0 0
        %1534 = vmatmul.mubr.bf16.gmra.mxu0 %v1459
        %v1535 = vpop.f32.mrf.mxu0
        %v1536 = vadd.f32 0.0, %v1535
        %v1537 = vpop.f32.mrf.mxu0
        %v1538 = vadd.f32 0.0, %v1537
        %v1539 = vpop.f32.mrf.mxu0
        %v1540 = vpop.f32.mrf.mxu0
        %1541 = vdwg.mxu0
        %v1542 = vadd.f32 %v1455, %v1495
        %v1543 = vadd.f32 %v1456, %v1497
        %v1544 = vadd.f32 %v1457, %v1536
        %v1545 = vadd.f32 %v1458, %v1538
        %v1546 = vxor.u32 %v1542, 2147483648
        %v1547 = vxor.u32 %v1543, 2147483648
        %v1548 = vxor.u32 %v1544, 2147483648
        %v1549 = vmul.f32 %v1546, 1.442695
        %v1550 = vpow.pop %v1549
        %v1551 = vmul.f32 %v1547, 1.442695
        %v1552 = vpow.pop %v1551
        %v1553 = vmul.f32 %v1548, 1.442695
        %v1554 = vpow.pop %v1553
        %v1555 = vadd.f32 %v1550, 1.0
        %v1556 = vadd.f32 %v1552, 1.0
        %v1557 = vadd.f32 %v1554, 1.0
        %v1558 = vrcp.pop %v1555
        %v1559 = vmul.f32 1.0, %v1558
        %v1560 = vrcp.pop %v1556
        %v1561 = vmul.f32 1.0, %v1560
        %v1562 = vrcp.pop %v1557
        %v1563 = vmul.f32 1.0, %v1562
        %v1564 = vtanh.pop %v1545
        %v1565 = vmul.f32 %v1561, %v1451
        %v1566 = vmul.f32 %v1559, %v1564
        %v1567 = vadd.f32 %v1565, %v1566
        %v1568 = vtanh.pop %v1567
        %v1569 = vmul.f32 %v1563, %v1568
        %1570 = vst [vmem:[#allocation2 + $0x10] sm:$0xff] %v1569
        %v1571 = vld [vmem:[#allocation3 + $0x60] sm:$0xff]
        %v1572 = vld [vmem:[#allocation3 + $0x68] sm:$0xff]
        %v1573 = vld [vmem:[#allocation3 + $0x70] sm:$0xff]
        %v1574 = vld [vmem:[#allocation3 + $0x78] sm:$0xff]
        %v1575 = vpack.c.bf16 %v1569, %v1569
        %1576 = vmatprep.subr.bf16.mxu0 %v1193
        %1577 = vmatpush1.bf16.msra.mxu0 %v1192
        %1578 = vmatprep.subr.bf16.mxu0 %v1189
        %1579 = vmatpush1.bf16.msra.mxu0 %v1188
        %1580 = vmatprep.subr.bf16.mxu0 %v1185
        %1581 = vmatpush1.bf16.msra.mxu0 %v1184
        %1582 = vmatprep.subr.bf16.mxu0 %v1181
        %1583 = vmatpush1.bf16.msra.mxu0 %v1180
        %1584 = vmatprep.subr.bf16.mxu0 %v1177
        %1585 = vmatpush1.bf16.msra.mxu0 %v1176
        %1586 = vmatprep.subr.bf16.mxu0 %v1173
        %1587 = vmatpush1.bf16.msra.mxu0 %v1172
        %1588 = vmatprep.subr.bf16.mxu0 %v1169
        %1589 = vmatpush1.bf16.msra.mxu0 %v1168
        %1590 = vmatprep.subr.bf16.mxu0 %v1165
        %1591 = vmatpush1.bf16.msra.mxu0 %v1164
        %1592 = vmatprep.subr.bf16.mxu0 0
        %1593 = vmatpush2.bf16.msra.mxu0 0
        %1594 = vmatprep.subr.bf16.mxu0 0
        %1595 = vmatpush2.bf16.msra.mxu0 0
        %1596 = vmatprep.subr.bf16.mxu0 0
        %1597 = vmatpush2.bf16.msra.mxu0 0
        %1598 = vmatprep.subr.bf16.mxu0 0
        %1599 = vmatpush2.bf16.msra.mxu0 0
        %1600 = vmatprep.subr.bf16.mxu0 0
        %1601 = vmatpush2.bf16.msra.mxu0 0
        %1602 = vmatprep.subr.bf16.mxu0 0
        %1603 = vmatpush2.bf16.msra.mxu0 0
        %1604 = vmatprep.subr.bf16.mxu0 0
        %1605 = vmatpush2.bf16.msra.mxu0 0
        %1606 = vmatprep.subr.bf16.mxu0 0
        %1607 = vmatpush2.bf16.msra.mxu0 0
        %1608 = vmatprep.mubr.bf16.mxu0 0
        %1609 = vmatmul.mubr.bf16.gmra.mxu0 %v1575
        %v1610 = vpop.f32.mrf.mxu0
        %v1611 = vadd.f32 0.0, %v1610
        %v1612 = vpop.f32.mrf.mxu0
        %v1613 = vadd.f32 0.0, %v1612
        %v1614 = vpop.f32.mrf.mxu0
        %v1615 = vpop.f32.mrf.mxu0
        %1616 = vdwg.mxu0
        %1617 = vmatprep.subr.bf16.mxu0 %v1195
        %1618 = vmatpush1.bf16.msra.mxu0 %v1194
        %1619 = vmatprep.subr.bf16.mxu0 %v1191
        %1620 = vmatpush1.bf16.msra.mxu0 %v1190
        %1621 = vmatprep.subr.bf16.mxu0 %v1187
        %1622 = vmatpush1.bf16.msra.mxu0 %v1186
        %1623 = vmatprep.subr.bf16.mxu0 %v1183
        %1624 = vmatpush1.bf16.msra.mxu0 %v1182
        %1625 = vmatprep.subr.bf16.mxu0 %v1179
        %1626 = vmatpush1.bf16.msra.mxu0 %v1178
        %1627 = vmatprep.subr.bf16.mxu0 %v1175
        %1628 = vmatpush1.bf16.msra.mxu0 %v1174
        %1629 = vmatprep.subr.bf16.mxu0 %v1171
        %1630 = vmatpush1.bf16.msra.mxu0 %v1170
        %1631 = vmatprep.subr.bf16.mxu0 %v1167
        %1632 = vmatpush1.bf16.msra.mxu0 %v1166
        %1633 = vmatprep.subr.bf16.mxu0 0
        %1634 = vmatpush2.bf16.msra.mxu0 0
        %1635 = vmatprep.subr.bf16.mxu0 0
        %1636 = vmatpush2.bf16.msra.mxu0 0
        %1637 = vmatprep.subr.bf16.mxu0 0
        %1638 = vmatpush2.bf16.msra.mxu0 0
        %1639 = vmatprep.subr.bf16.mxu0 0
        %1640 = vmatpush2.bf16.msra.mxu0 0
        %1641 = vmatprep.subr.bf16.mxu0 0
        %1642 = vmatpush2.bf16.msra.mxu0 0
        %1643 = vmatprep.subr.bf16.mxu0 0
        %1644 = vmatpush2.bf16.msra.mxu0 0
        %1645 = vmatprep.subr.bf16.mxu0 0
        %1646 = vmatpush2.bf16.msra.mxu0 0
        %1647 = vmatprep.subr.bf16.mxu0 0
        %1648 = vmatpush2.bf16.msra.mxu0 0
        %1649 = vmatprep.mubr.bf16.mxu0 0
        %1650 = vmatmul.mubr.bf16.gmra.mxu0 %v1575
        %v1651 = vpop.f32.mrf.mxu0
        %v1652 = vadd.f32 0.0, %v1651
        %v1653 = vpop.f32.mrf.mxu0
        %v1654 = vadd.f32 0.0, %v1653
        %v1655 = vpop.f32.mrf.mxu0
        %v1656 = vpop.f32.mrf.mxu0
        %1657 = vdwg.mxu0
        %v1658 = vadd.f32 %v1571, %v1611
        %v1659 = vadd.f32 %v1572, %v1613
        %v1660 = vadd.f32 %v1573, %v1652
        %v1661 = vadd.f32 %v1574, %v1654
        %v1662 = vxor.u32 %v1658, 2147483648
        %v1663 = vxor.u32 %v1659, 2147483648
        %v1664 = vxor.u32 %v1660, 2147483648
        %v1665 = vmul.f32 %v1662, 1.442695
        %v1666 = vpow.pop %v1665
        %v1667 = vmul.f32 %v1663, 1.442695
        %v1668 = vpow.pop %v1667
        %v1669 = vmul.f32 %v1664, 1.442695
        %v1670 = vpow.pop %v1669
        %v1671 = vadd.f32 %v1666, 1.0
        %v1672 = vadd.f32 %v1668, 1.0
        %v1673 = vadd.f32 %v1670, 1.0
        %v1674 = vrcp.pop %v1671
        %v1675 = vmul.f32 1.0, %v1674
        %v1676 = vrcp.pop %v1672
        %v1677 = vmul.f32 1.0, %v1676
        %v1678 = vrcp.pop %v1673
        %v1679 = vmul.f32 1.0, %v1678
        %v1680 = vtanh.pop %v1661
        %v1681 = vmul.f32 %v1677, %v1567
        %v1682 = vmul.f32 %v1675, %v1680
        %v1683 = vadd.f32 %v1681, %v1682
        %v1684 = vtanh.pop %v1683
        %v1685 = vmul.f32 %v1679, %v1684
        %1686 = vst [vmem:[#allocation2 + $0x18] sm:$0xff] %v1685
        %v1687 = vld [vmem:[#allocation3 + $0x80] sm:$0xff]
        %v1688 = vld [vmem:[#allocation3 + $0x88] sm:$0xff]
        %v1689 = vld [vmem:[#allocation3 + $0x90] sm:$0xff]
        %v1690 = vld [vmem:[#allocation3 + $0x98] sm:$0xff]
        %v1691 = vpack.c.bf16 %v1685, %v1685
        %1692 = vmatprep.subr.bf16.mxu0 %v1193
        %1693 = vmatpush1.bf16.msra.mxu0 %v1192
        %1694 = vmatprep.subr.bf16.mxu0 %v1189
        %1695 = vmatpush1.bf16.msra.mxu0 %v1188
        %1696 = vmatprep.subr.bf16.mxu0 %v1185
        %1697 = vmatpush1.bf16.msra.mxu0 %v1184
        %1698 = vmatprep.subr.bf16.mxu0 %v1181
        %1699 = vmatpush1.bf16.msra.mxu0 %v1180
        %1700 = vmatprep.subr.bf16.mxu0 %v1177
        %1701 = vmatpush1.bf16.msra.mxu0 %v1176
        %1702 = vmatprep.subr.bf16.mxu0 %v1173
        %1703 = vmatpush1.bf16.msra.mxu0 %v1172
        %1704 = vmatprep.subr.bf16.mxu0 %v1169
        %1705 = vmatpush1.bf16.msra.mxu0 %v1168
        %1706 = vmatprep.subr.bf16.mxu0 %v1165
        %1707 = vmatpush1.bf16.msra.mxu0 %v1164
        %1708 = vmatprep.subr.bf16.mxu0 0
        %1709 = vmatpush2.bf16.msra.mxu0 0
        %1710 = vmatprep.subr.bf16.mxu0 0
        %1711 = vmatpush2.bf16.msra.mxu0 0
        %1712 = vmatprep.subr.bf16.mxu0 0
        %1713 = vmatpush2.bf16.msra.mxu0 0
        %1714 = vmatprep.subr.bf16.mxu0 0
        %1715 = vmatpush2.bf16.msra.mxu0 0
        %1716 = vmatprep.subr.bf16.mxu0 0
        %1717 = vmatpush2.bf16.msra.mxu0 0
        %1718 = vmatprep.subr.bf16.mxu0 0
        %1719 = vmatpush2.bf16.msra.mxu0 0
        %1720 = vmatprep.subr.bf16.mxu0 0
        %1721 = vmatpush2.bf16.msra.mxu0 0
        %1722 = vmatprep.subr.bf16.mxu0 0
        %1723 = vmatpush2.bf16.msra.mxu0 0
        %1724 = vmatprep.mubr.bf16.mxu0 0
        %1725 = vmatmul.mubr.bf16.gmra.mxu0 %v1691
        %v1726 = vpop.f32.mrf.mxu0
        %v1727 = vadd.f32 0.0, %v1726
        %v1728 = vpop.f32.mrf.mxu0
        %v1729 = vadd.f32 0.0, %v1728
        %v1730 = vpop.f32.mrf.mxu0
        %v1731 = vpop.f32.mrf.mxu0
        %1732 = vdwg.mxu0
        %1733 = vmatprep.subr.bf16.mxu0 %v1195
        %1734 = vmatpush1.bf16.msra.mxu0 %v1194
        %1735 = vmatprep.subr.bf16.mxu0 %v1191
        %1736 = vmatpush1.bf16.msra.mxu0 %v1190
        %1737 = vmatprep.subr.bf16.mxu0 %v1187
        %1738 = vmatpush1.bf16.msra.mxu0 %v1186
        %1739 = vmatprep.subr.bf16.mxu0 %v1183
        %1740 = vmatpush1.bf16.msra.mxu0 %v1182
        %1741 = vmatprep.subr.bf16.mxu0 %v1179
        %1742 = vmatpush1.bf16.msra.mxu0 %v1178
        %1743 = vmatprep.subr.bf16.mxu0 %v1175
        %1744 = vmatpush1.bf16.msra.mxu0 %v1174
        %1745 = vmatprep.subr.bf16.mxu0 %v1171
        %1746 = vmatpush1.bf16.msra.mxu0 %v1170
        %1747 = vmatprep.subr.bf16.mxu0 %v1167
        %1748 = vmatpush1.bf16.msra.mxu0 %v1166
        %1749 = vmatprep.subr.bf16.mxu0 0
        %1750 = vmatpush2.bf16.msra.mxu0 0
        %1751 = vmatprep.subr.bf16.mxu0 0
        %1752 = vmatpush2.bf16.msra.mxu0 0
        %1753 = vmatprep.subr.bf16.mxu0 0
        %1754 = vmatpush2.bf16.msra.mxu0 0
        %1755 = vmatprep.subr.bf16.mxu0 0
        %1756 = vmatpush2.bf16.msra.mxu0 0
        %1757 = vmatprep.subr.bf16.mxu0 0
        %1758 = vmatpush2.bf16.msra.mxu0 0
        %1759 = vmatprep.subr.bf16.mxu0 0
        %1760 = vmatpush2.bf16.msra.mxu0 0
        %1761 = vmatprep.subr.bf16.mxu0 0
        %1762 = vmatpush2.bf16.msra.mxu0 0
        %1763 = vmatprep.subr.bf16.mxu0 0
        %1764 = vmatpush2.bf16.msra.mxu0 0
        %1765 = vmatprep.mubr.bf16.mxu0 0
        %1766 = vmatmul.mubr.bf16.gmra.mxu0 %v1691
        %v1767 = vpop.f32.mrf.mxu0
        %v1768 = vadd.f32 0.0, %v1767
        %v1769 = vpop.f32.mrf.mxu0
        %v1770 = vadd.f32 0.0, %v1769
        %v1771 = vpop.f32.mrf.mxu0
        %v1772 = vpop.f32.mrf.mxu0
        %1773 = vdwg.mxu0
        %v1774 = vadd.f32 %v1687, %v1727
        %v1775 = vadd.f32 %v1688, %v1729
        %v1776 = vadd.f32 %v1689, %v1768
        %v1777 = vadd.f32 %v1690, %v1770
        %v1778 = vxor.u32 %v1774, 2147483648
        %v1779 = vxor.u32 %v1775, 2147483648
        %v1780 = vxor.u32 %v1776, 2147483648
        %v1781 = vmul.f32 %v1778, 1.442695
        %v1782 = vpow.pop %v1781
        %v1783 = vmul.f32 %v1779, 1.442695
        %v1784 = vpow.pop %v1783
        %v1785 = vmul.f32 %v1780, 1.442695
        %v1786 = vpow.pop %v1785
        %v1787 = vadd.f32 %v1782, 1.0
        %v1788 = vadd.f32 %v1784, 1.0
        %v1789 = vadd.f32 %v1786, 1.0
        %v1790 = vrcp.pop %v1787
        %v1791 = vmul.f32 1.0, %v1790
        %v1792 = vrcp.pop %v1788
        %v1793 = vmul.f32 1.0, %v1792
        %v1794 = vrcp.pop %v1789
        %v1795 = vmul.f32 1.0, %v1794
        %v1796 = vtanh.pop %v1777
        %v1797 = vmul.f32 %v1793, %v1683
        %v1798 = vmul.f32 %v1791, %v1796
        %v1799 = vadd.f32 %v1797, %v1798
        %v1800 = vtanh.pop %v1799
        %v1801 = vmul.f32 %v1795, %v1800
        %1802 = vst [vmem:[#allocation2 + $0x20] sm:$0xff] %v1801
        %v1803 = vld [vmem:[#allocation3 + $0xa0] sm:$0xff]
        %v1804 = vld [vmem:[#allocation3 + $0xa8] sm:$0xff]
        %v1805 = vld [vmem:[#allocation3 + $0xb0] sm:$0xff]
        %v1806 = vld [vmem:[#allocation3 + $0xb8] sm:$0xff]
        %v1807 = vpack.c.bf16 %v1801, %v1801
        %1808 = vmatprep.subr.bf16.mxu0 %v1193
        %1809 = vmatpush1.bf16.msra.mxu0 %v1192
        %1810 = vmatprep.subr.bf16.mxu0 %v1189
        %1811 = vmatpush1.bf16.msra.mxu0 %v1188
        %1812 = vmatprep.subr.bf16.mxu0 %v1185
        %1813 = vmatpush1.bf16.msra.mxu0 %v1184
        %1814 = vmatprep.subr.bf16.mxu0 %v1181
        %1815 = vmatpush1.bf16.msra.mxu0 %v1180
        %1816 = vmatprep.subr.bf16.mxu0 %v1177
        %1817 = vmatpush1.bf16.msra.mxu0 %v1176
        %1818 = vmatprep.subr.bf16.mxu0 %v1173
        %1819 = vmatpush1.bf16.msra.mxu0 %v1172
        %1820 = vmatprep.subr.bf16.mxu0 %v1169
        %1821 = vmatpush1.bf16.msra.mxu0 %v1168
        %1822 = vmatprep.subr.bf16.mxu0 %v1165
        %1823 = vmatpush1.bf16.msra.mxu0 %v1164
        %1824 = vmatprep.subr.bf16.mxu0 0
        %1825 = vmatpush2.bf16.msra.mxu0 0
        %1826 = vmatprep.subr.bf16.mxu0 0
        %1827 = vmatpush2.bf16.msra.mxu0 0
        %1828 = vmatprep.subr.bf16.mxu0 0
        %1829 = vmatpush2.bf16.msra.mxu0 0
        %1830 = vmatprep.subr.bf16.mxu0 0
        %1831 = vmatpush2.bf16.msra.mxu0 0
        %1832 = vmatprep.subr.bf16.mxu0 0
        %1833 = vmatpush2.bf16.msra.mxu0 0
        %1834 = vmatprep.subr.bf16.mxu0 0
        %1835 = vmatpush2.bf16.msra.mxu0 0
        %1836 = vmatprep.subr.bf16.mxu0 0
        %1837 = vmatpush2.bf16.msra.mxu0 0
        %1838 = vmatprep.subr.bf16.mxu0 0
        %1839 = vmatpush2.bf16.msra.mxu0 0
        %1840 = vmatprep.mubr.bf16.mxu0 0
        %1841 = vmatmul.mubr.bf16.gmra.mxu0 %v1807
        %v1842 = vpop.f32.mrf.mxu0
        %v1843 = vadd.f32 0.0, %v1842
        %v1844 = vpop.f32.mrf.mxu0
        %v1845 = vadd.f32 0.0, %v1844
        %v1846 = vpop.f32.mrf.mxu0
        %v1847 = vpop.f32.mrf.mxu0
        %1848 = vdwg.mxu0
        %1849 = vmatprep.subr.bf16.mxu0 %v1195
        %1850 = vmatpush1.bf16.msra.mxu0 %v1194
        %1851 = vmatprep.subr.bf16.mxu0 %v1191
        %1852 = vmatpush1.bf16.msra.mxu0 %v1190
        %1853 = vmatprep.subr.bf16.mxu0 %v1187
        %1854 = vmatpush1.bf16.msra.mxu0 %v1186
        %1855 = vmatprep.subr.bf16.mxu0 %v1183
        %1856 = vmatpush1.bf16.msra.mxu0 %v1182
        %1857 = vmatprep.subr.bf16.mxu0 %v1179
        %1858 = vmatpush1.bf16.msra.mxu0 %v1178
        %1859 = vmatprep.subr.bf16.mxu0 %v1175
        %1860 = vmatpush1.bf16.msra.mxu0 %v1174
        %1861 = vmatprep.subr.bf16.mxu0 %v1171
        %1862 = vmatpush1.bf16.msra.mxu0 %v1170
        %1863 = vmatprep.subr.bf16.mxu0 %v1167
        %1864 = vmatpush1.bf16.msra.mxu0 %v1166
        %1865 = vmatprep.subr.bf16.mxu0 0
        %1866 = vmatpush2.bf16.msra.mxu0 0
        %1867 = vmatprep.subr.bf16.mxu0 0
        %1868 = vmatpush2.bf16.msra.mxu0 0
        %1869 = vmatprep.subr.bf16.mxu0 0
        %1870 = vmatpush2.bf16.msra.mxu0 0
        %1871 = vmatprep.subr.bf16.mxu0 0
        %1872 = vmatpush2.bf16.msra.mxu0 0
        %1873 = vmatprep.subr.bf16.mxu0 0
        %1874 = vmatpush2.bf16.msra.mxu0 0
        %1875 = vmatprep.subr.bf16.mxu0 0
        %1876 = vmatpush2.bf16.msra.mxu0 0
        %1877 = vmatprep.subr.bf16.mxu0 0
        %1878 = vmatpush2.bf16.msra.mxu0 0
        %1879 = vmatprep.subr.bf16.mxu0 0
        %1880 = vmatpush2.bf16.msra.mxu0 0
        %1881 = vmatprep.mubr.bf16.mxu0 0
        %1882 = vmatmul.mubr.bf16.gmra.mxu0 %v1807
        %v1883 = vpop.f32.mrf.mxu0
        %v1884 = vadd.f32 0.0, %v1883
        %v1885 = vpop.f32.mrf.mxu0
        %v1886 = vadd.f32 0.0, %v1885
        %v1887 = vpop.f32.mrf.mxu0
        %v1888 = vpop.f32.mrf.mxu0
        %1889 = vdwg.mxu0
        %v1890 = vadd.f32 %v1803, %v1843
        %v1891 = vadd.f32 %v1804, %v1845
        %v1892 = vadd.f32 %v1805, %v1884
        %v1893 = vadd.f32 %v1806, %v1886
        %v1894 = vxor.u32 %v1890, 2147483648
        %v1895 = vxor.u32 %v1891, 2147483648
        %v1896 = vxor.u32 %v1892, 2147483648
        %v1897 = vmul.f32 %v1894, 1.442695
        %v1898 = vpow.pop %v1897
        %v1899 = vmul.f32 %v1895, 1.442695
        %v1900 = vpow.pop %v1899
        %v1901 = vmul.f32 %v1896, 1.442695
        %v1902 = vpow.pop %v1901
        %v1903 = vadd.f32 %v1898, 1.0
        %v1904 = vadd.f32 %v1900, 1.0
        %v1905 = vadd.f32 %v1902, 1.0
        %v1906 = vrcp.pop %v1903
        %v1907 = vmul.f32 1.0, %v1906
        %v1908 = vrcp.pop %v1904
        %v1909 = vmul.f32 1.0, %v1908
        %v1910 = vrcp.pop %v1905
        %v1911 = vmul.f32 1.0, %v1910
        %v1912 = vtanh.pop %v1893
        %v1913 = vmul.f32 %v1909, %v1799
        %v1914 = vmul.f32 %v1907, %v1912
        %v1915 = vadd.f32 %v1913, %v1914
        %v1916 = vtanh.pop %v1915
        %v1917 = vmul.f32 %v1911, %v1916
        %1918 = vst [vmem:[#allocation2 + $0x28] sm:$0xff] %v1917
        %v1919 = vld [vmem:[#allocation3 + $0xc0] sm:$0xff]
        %v1920 = vld [vmem:[#allocation3 + $0xc8] sm:$0xff]
        %v1921 = vld [vmem:[#allocation3 + $0xd0] sm:$0xff]
        %v1922 = vld [vmem:[#allocation3 + $0xd8] sm:$0xff]
        %v1923 = vpack.c.bf16 %v1917, %v1917
        %1924 = vmatprep.subr.bf16.mxu0 %v1193
        %1925 = vmatpush1.bf16.msra.mxu0 %v1192
        %1926 = vmatprep.subr.bf16.mxu0 %v1189
        %1927 = vmatpush1.bf16.msra.mxu0 %v1188
        %1928 = vmatprep.subr.bf16.mxu0 %v1185
        %1929 = vmatpush1.bf16.msra.mxu0 %v1184
        %1930 = vmatprep.subr.bf16.mxu0 %v1181
        %1931 = vmatpush1.bf16.msra.mxu0 %v1180
        %1932 = vmatprep.subr.bf16.mxu0 %v1177
        %1933 = vmatpush1.bf16.msra.mxu0 %v1176
        %1934 = vmatprep.subr.bf16.mxu0 %v1173
        %1935 = vmatpush1.bf16.msra.mxu0 %v1172
        %1936 = vmatprep.subr.bf16.mxu0 %v1169
        %1937 = vmatpush1.bf16.msra.mxu0 %v1168
        %1938 = vmatprep.subr.bf16.mxu0 %v1165
        %1939 = vmatpush1.bf16.msra.mxu0 %v1164
        %1940 = vmatprep.subr.bf16.mxu0 0
        %1941 = vmatpush2.bf16.msra.mxu0 0
        %1942 = vmatprep.subr.bf16.mxu0 0
        %1943 = vmatpush2.bf16.msra.mxu0 0
        %1944 = vmatprep.subr.bf16.mxu0 0
        %1945 = vmatpush2.bf16.msra.mxu0 0
        %1946 = vmatprep.subr.bf16.mxu0 0
        %1947 = vmatpush2.bf16.msra.mxu0 0
        %1948 = vmatprep.subr.bf16.mxu0 0
        %1949 = vmatpush2.bf16.msra.mxu0 0
        %1950 = vmatprep.subr.bf16.mxu0 0
        %1951 = vmatpush2.bf16.msra.mxu0 0
        %1952 = vmatprep.subr.bf16.mxu0 0
        %1953 = vmatpush2.bf16.msra.mxu0 0
        %1954 = vmatprep.subr.bf16.mxu0 0
        %1955 = vmatpush2.bf16.msra.mxu0 0
        %1956 = vmatprep.mubr.bf16.mxu0 0
        %1957 = vmatmul.mubr.bf16.gmra.mxu0 %v1923
        %v1958 = vpop.f32.mrf.mxu0
        %v1959 = vadd.f32 0.0, %v1958
        %v1960 = vpop.f32.mrf.mxu0
        %v1961 = vadd.f32 0.0, %v1960
        %v1962 = vpop.f32.mrf.mxu0
        %v1963 = vpop.f32.mrf.mxu0
        %1964 = vdwg.mxu0
        %1965 = vmatprep.subr.bf16.mxu0 %v1195
        %1966 = vmatpush1.bf16.msra.mxu0 %v1194
        %1967 = vmatprep.subr.bf16.mxu0 %v1191
        %1968 = vmatpush1.bf16.msra.mxu0 %v1190
        %1969 = vmatprep.subr.bf16.mxu0 %v1187
        %1970 = vmatpush1.bf16.msra.mxu0 %v1186
        %1971 = vmatprep.subr.bf16.mxu0 %v1183
        %1972 = vmatpush1.bf16.msra.mxu0 %v1182
        %1973 = vmatprep.subr.bf16.mxu0 %v1179
        %1974 = vmatpush1.bf16.msra.mxu0 %v1178
        %1975 = vmatprep.subr.bf16.mxu0 %v1175
        %1976 = vmatpush1.bf16.msra.mxu0 %v1174
        %1977 = vmatprep.subr.bf16.mxu0 %v1171
        %1978 = vmatpush1.bf16.msra.mxu0 %v1170
        %1979 = vmatprep.subr.bf16.mxu0 %v1167
        %1980 = vmatpush1.bf16.msra.mxu0 %v1166
        %1981 = vmatprep.subr.bf16.mxu0 0
        %1982 = vmatpush2.bf16.msra.mxu0 0
        %1983 = vmatprep.subr.bf16.mxu0 0
        %1984 = vmatpush2.bf16.msra.mxu0 0
        %1985 = vmatprep.subr.bf16.mxu0 0
        %1986 = vmatpush2.bf16.msra.mxu0 0
        %1987 = vmatprep.subr.bf16.mxu0 0
        %1988 = vmatpush2.bf16.msra.mxu0 0
        %1989 = vmatprep.subr.bf16.mxu0 0
        %1990 = vmatpush2.bf16.msra.mxu0 0
        %1991 = vmatprep.subr.bf16.mxu0 0
        %1992 = vmatpush2.bf16.msra.mxu0 0
        %1993 = vmatprep.subr.bf16.mxu0 0
        %1994 = vmatpush2.bf16.msra.mxu0 0
        %1995 = vmatprep.subr.bf16.mxu0 0
        %1996 = vmatpush2.bf16.msra.mxu0 0
        %1997 = vmatprep.mubr.bf16.mxu0 0
        %1998 = vmatmul.mubr.bf16.gmra.mxu0 %v1923
        %v1999 = vpop.f32.mrf.mxu0
        %v2000 = vadd.f32 0.0, %v1999
        %v2001 = vpop.f32.mrf.mxu0
        %v2002 = vadd.f32 0.0, %v2001
        %v2003 = vpop.f32.mrf.mxu0
        %v2004 = vpop.f32.mrf.mxu0
        %2005 = vdwg.mxu0
        %v2006 = vadd.f32 %v1919, %v1959
        %v2007 = vadd.f32 %v1920, %v1961
        %v2008 = vadd.f32 %v1921, %v2000
        %v2009 = vadd.f32 %v1922, %v2002
        %v2010 = vxor.u32 %v2006, 2147483648
        %v2011 = vxor.u32 %v2007, 2147483648
        %v2012 = vxor.u32 %v2008, 2147483648
        %v2013 = vmul.f32 %v2010, 1.442695
        %v2014 = vpow.pop %v2013
        %v2015 = vmul.f32 %v2011, 1.442695
        %v2016 = vpow.pop %v2015
        %v2017 = vmul.f32 %v2012, 1.442695
        %v2018 = vpow.pop %v2017
        %v2019 = vadd.f32 %v2014, 1.0
        %v2020 = vadd.f32 %v2016, 1.0
        %v2021 = vadd.f32 %v2018, 1.0
        %v2022 = vrcp.pop %v2019
        %v2023 = vmul.f32 1.0, %v2022
        %v2024 = vrcp.pop %v2020
        %v2025 = vmul.f32 1.0, %v2024
        %v2026 = vrcp.pop %v2021
        %v2027 = vmul.f32 1.0, %v2026
        %v2028 = vtanh.pop %v2009
        %v2029 = vmul.f32 %v2025, %v1915
        %v2030 = vmul.f32 %v2023, %v2028
        %v2031 = vadd.f32 %v2029, %v2030
        %v2032 = vtanh.pop %v2031
        %v2033 = vmul.f32 %v2027, %v2032
        %2034 = vst [vmem:[#allocation2 + $0x30] sm:$0xff] %v2033
        %v2035 = vld [vmem:[#allocation3 + $0xe0] sm:$0xff]
        %v2036 = vld [vmem:[#allocation3 + $0xe8] sm:$0xff]
        %v2037 = vld [vmem:[#allocation3 + $0xf0] sm:$0xff]
        %v2038 = vld [vmem:[#allocation3 + $0xf8] sm:$0xff]
        %v2039 = vpack.c.bf16 %v2033, %v2033
        %2040 = vmatprep.subr.bf16.mxu0 %v1193
        %2041 = vmatpush1.bf16.msra.mxu0 %v1192
        %2042 = vmatprep.subr.bf16.mxu0 %v1189
        %2043 = vmatpush1.bf16.msra.mxu0 %v1188
        %2044 = vmatprep.subr.bf16.mxu0 %v1185
        %2045 = vmatpush1.bf16.msra.mxu0 %v1184
        %2046 = vmatprep.subr.bf16.mxu0 %v1181
        %2047 = vmatpush1.bf16.msra.mxu0 %v1180
        %2048 = vmatprep.subr.bf16.mxu0 %v1177
        %2049 = vmatpush1.bf16.msra.mxu0 %v1176
        %2050 = vmatprep.subr.bf16.mxu0 %v1173
        %2051 = vmatpush1.bf16.msra.mxu0 %v1172
        %2052 = vmatprep.subr.bf16.mxu0 %v1169
        %2053 = vmatpush1.bf16.msra.mxu0 %v1168
        %2054 = vmatprep.subr.bf16.mxu0 %v1165
        %2055 = vmatpush1.bf16.msra.mxu0 %v1164
        %2056 = vmatprep.subr.bf16.mxu0 0
        %2057 = vmatpush2.bf16.msra.mxu0 0
        %2058 = vmatprep.subr.bf16.mxu0 0
        %2059 = vmatpush2.bf16.msra.mxu0 0
        %2060 = vmatprep.subr.bf16.mxu0 0
        %2061 = vmatpush2.bf16.msra.mxu0 0
        %2062 = vmatprep.subr.bf16.mxu0 0
        %2063 = vmatpush2.bf16.msra.mxu0 0
        %2064 = vmatprep.subr.bf16.mxu0 0
        %2065 = vmatpush2.bf16.msra.mxu0 0
        %2066 = vmatprep.subr.bf16.mxu0 0
        %2067 = vmatpush2.bf16.msra.mxu0 0
        %2068 = vmatprep.subr.bf16.mxu0 0
        %2069 = vmatpush2.bf16.msra.mxu0 0
        %2070 = vmatprep.subr.bf16.mxu0 0
        %2071 = vmatpush2.bf16.msra.mxu0 0
        %2072 = vmatprep.mubr.bf16.mxu0 0
        %2073 = vmatmul.mubr.bf16.gmra.mxu0 %v2039
        %v2074 = vpop.f32.mrf.mxu0
        %v2075 = vadd.f32 0.0, %v2074
        %v2076 = vpop.f32.mrf.mxu0
        %v2077 = vadd.f32 0.0, %v2076
        %v2078 = vpop.f32.mrf.mxu0
        %v2079 = vpop.f32.mrf.mxu0
        %2080 = vdwg.mxu0
        %2081 = vmatprep.subr.bf16.mxu0 %v1195
        %2082 = vmatpush1.bf16.msra.mxu0 %v1194
        %2083 = vmatprep.subr.bf16.mxu0 %v1191
        %2084 = vmatpush1.bf16.msra.mxu0 %v1190
        %2085 = vmatprep.subr.bf16.mxu0 %v1187
        %2086 = vmatpush1.bf16.msra.mxu0 %v1186
        %2087 = vmatprep.subr.bf16.mxu0 %v1183
        %2088 = vmatpush1.bf16.msra.mxu0 %v1182
        %2089 = vmatprep.subr.bf16.mxu0 %v1179
        %2090 = vmatpush1.bf16.msra.mxu0 %v1178
        %2091 = vmatprep.subr.bf16.mxu0 %v1175
        %2092 = vmatpush1.bf16.msra.mxu0 %v1174
        %2093 = vmatprep.subr.bf16.mxu0 %v1171
        %2094 = vmatpush1.bf16.msra.mxu0 %v1170
        %2095 = vmatprep.subr.bf16.mxu0 %v1167
        %2096 = vmatpush1.bf16.msra.mxu0 %v1166
        %2097 = vmatprep.subr.bf16.mxu0 0
        %2098 = vmatpush2.bf16.msra.mxu0 0
        %2099 = vmatprep.subr.bf16.mxu0 0
        %2100 = vmatpush2.bf16.msra.mxu0 0
        %2101 = vmatprep.subr.bf16.mxu0 0
        %2102 = vmatpush2.bf16.msra.mxu0 0
        %2103 = vmatprep.subr.bf16.mxu0 0
        %2104 = vmatpush2.bf16.msra.mxu0 0
        %2105 = vmatprep.subr.bf16.mxu0 0
        %2106 = vmatpush2.bf16.msra.mxu0 0
        %2107 = vmatprep.subr.bf16.mxu0 0
        %2108 = vmatpush2.bf16.msra.mxu0 0
        %2109 = vmatprep.subr.bf16.mxu0 0
        %2110 = vmatpush2.bf16.msra.mxu0 0
        %2111 = vmatprep.subr.bf16.mxu0 0
        %2112 = vmatpush2.bf16.msra.mxu0 0
        %2113 = vmatprep.mubr.bf16.mxu0 0
        %2114 = vmatmul.mubr.bf16.gmra.mxu0 %v2039
        %v2115 = vpop.f32.mrf.mxu0
        %v2116 = vadd.f32 0.0, %v2115
        %v2117 = vpop.f32.mrf.mxu0
        %v2118 = vadd.f32 0.0, %v2117
        %v2119 = vpop.f32.mrf.mxu0
        %v2120 = vpop.f32.mrf.mxu0
        %2121 = vdwg.mxu0
        %v2122 = vadd.f32 %v2035, %v2075
        %v2123 = vadd.f32 %v2036, %v2077
        %v2124 = vadd.f32 %v2037, %v2116
        %v2125 = vadd.f32 %v2038, %v2118
        %v2126 = vxor.u32 %v2122, 2147483648
        %v2127 = vxor.u32 %v2123, 2147483648
        %v2128 = vxor.u32 %v2124, 2147483648
        %v2129 = vmul.f32 %v2126, 1.442695
        %v2130 = vpow.pop %v2129
        %v2131 = vmul.f32 %v2127, 1.442695
        %v2132 = vpow.pop %v2131
        %v2133 = vmul.f32 %v2128, 1.442695
        %v2134 = vpow.pop %v2133
        %v2135 = vadd.f32 %v2130, 1.0
        %v2136 = vadd.f32 %v2132, 1.0
        %v2137 = vadd.f32 %v2134, 1.0
        %v2138 = vrcp.pop %v2135
        %v2139 = vmul.f32 1.0, %v2138
        %v2140 = vrcp.pop %v2136
        %v2141 = vmul.f32 1.0, %v2140
        %v2142 = vrcp.pop %v2137
        %v2143 = vmul.f32 1.0, %v2142
        %v2144 = vtanh.pop %v2125
        %v2145 = vmul.f32 %v2141, %v2031
        %v2146 = vmul.f32 %v2139, %v2144
        %v2147 = vadd.f32 %v2145, %v2146
        %v2148 = vtanh.pop %v2147
        %v2149 = vmul.f32 %v2143, %v2148
        %2150 = vst [vmem:[#allocation2 + $0x38] sm:$0xff] %v2149
        %p2151 = scmp.eq.s32.totalorder %s27, 2
        // Predicated region
        $region77: #{lstm_op_forward.1} parent=55 // pred_check
          %p2152 = pneg %p2151
        $region78: #{lstm_op_forward.1} parent=55 // pred_check_branch
          %2154 = sbr.rel (%p2152) target = $region80
        $region79: #{lstm_op_forward.1} parent=55 // pred_region
          %v2155 = vld [vmem:[#allocation2] sm:$0xff]
          %v2156 = vld [vmem:[#allocation2 + $0x8] sm:$0xff]
          %v2157 = vld [vmem:[#allocation2 + $0x10] sm:$0xff]
          %v2158 = vld [vmem:[#allocation2 + $0x18] sm:$0xff]
          %v2159 = vld [vmem:[#allocation2 + $0x20] sm:$0xff]
          %v2160 = vld [vmem:[#allocation2 + $0x28] sm:$0xff]
          %v2161 = vld [vmem:[#allocation2 + $0x30] sm:$0xff]
          %v2162 = vld [vmem:[#allocation2 + $0x38] sm:$0xff]
          %v2163 = vpack.c.bf16 %v2156, %v2155
          %v2164 = vpack.c.bf16 %v2158, %v2157
          %v2165 = vpack.c.bf16 %v2160, %v2159
          %v2166 = vpack.c.bf16 %v2162, %v2161
          %v2167 = vld [vmem:[#allocation8] sm:$0xf]
          %v2168 = vld [vmem:[#allocation8 + $0x4] sm:$0xf]
          %v2169 = vld [vmem:[#allocation8 + $0x8] sm:$0xf]
          %v2170 = vld [vmem:[#allocation8 + $0xc] sm:$0xf]
          %v2171 = vld [vmem:[#allocation8 + $0x10] sm:$0xf]
          %v2172 = vld [vmem:[#allocation8 + $0x14] sm:$0xf]
          %v2173 = vld [vmem:[#allocation8 + $0x18] sm:$0xf]
          %v2174 = vld [vmem:[#allocation8 + $0x1c] sm:$0xf]
          %v2175 = vld [vmem:[#allocation8 + $0x20] sm:$0xf]
          %v2176 = vld [vmem:[#allocation8 + $0x24] sm:$0xf]
          %v2177 = vld [vmem:[#allocation8 + $0x28] sm:$0xf]
          %v2178 = vld [vmem:[#allocation8 + $0x2c] sm:$0xf]
          %v2179 = vld [vmem:[#allocation8 + $0x30] sm:$0xf]
          %v2180 = vld [vmem:[#allocation8 + $0x34] sm:$0xf]
          %v2181 = vld [vmem:[#allocation8 + $0x38] sm:$0xf]
          %v2182 = vld [vmem:[#allocation8 + $0x3c] sm:$0xf]
          %v2183 = vld [vmem:[%s6] sm:$0x1]
          %v2185 = vlaneseq
          %v2186 = vshrl.u32 %v2185, 7
          %v2187 = vsub.s32 0, %v2186
          %v2188 = vrot.slane %v2183, %v2187
          %v2206 = vunpack.c.l.b16 %v2167
          %v2207 = vunpack.c.l.b16 %v2168
          %v2208 = vunpack.c.l.b16 %v2169
          %v2209 = vunpack.c.l.b16 %v2170
          %v2210 = vunpack.c.l.b16 %v2171
          %v2211 = vunpack.c.l.b16 %v2172
          %v2212 = vunpack.c.l.b16 %v2173
          %v2213 = vunpack.c.l.b16 %v2174
          %v2214 = vunpack.c.l.b16 %v2175
          %v2215 = vunpack.c.l.b16 %v2176
          %v2216 = vunpack.c.l.b16 %v2177
          %v2217 = vunpack.c.l.b16 %v2178
          %v2218 = vunpack.c.l.b16 %v2179
          %v2219 = vunpack.c.l.b16 %v2180
          %v2220 = vunpack.c.l.b16 %v2181
          %v2221 = vunpack.c.l.b16 %v2182
          %v2222 = vpack.c.b16 %v2207, %v2206
          %v2223 = vpack.c.b16 %v2209, %v2208
          %v2224 = vpack.c.b16 %v2211, %v2210
          %v2225 = vpack.c.b16 %v2213, %v2212
          %v2226 = vpack.c.b16 %v2215, %v2214
          %v2227 = vpack.c.b16 %v2217, %v2216
          %v2228 = vpack.c.b16 %v2219, %v2218
          %v2229 = vpack.c.b16 %v2221, %v2220
          %2238 = vmatprep.subr.bf16.mxu0 0
          %2239 = vmatpush1.bf16.msra.mxu0 %v2229
          %2240 = vmatprep.subr.bf16.mxu0 0
          %2241 = vmatpush1.bf16.msra.mxu0 %v2228
          %2242 = vmatprep.subr.bf16.mxu0 0
          %2243 = vmatpush1.bf16.msra.mxu0 %v2227
          %2244 = vmatprep.subr.bf16.mxu0 0
          %2245 = vmatpush1.bf16.msra.mxu0 %v2226
          %2246 = vmatprep.subr.bf16.mxu0 0
          %2247 = vmatpush1.bf16.msra.mxu0 %v2225
          %2248 = vmatprep.subr.bf16.mxu0 0
          %2249 = vmatpush1.bf16.msra.mxu0 %v2224
          %2250 = vmatprep.subr.bf16.mxu0 0
          %2251 = vmatpush1.bf16.msra.mxu0 %v2223
          %2252 = vmatprep.subr.bf16.mxu0 0
          %2253 = vmatpush1.bf16.msra.mxu0 %v2222
          %2254 = vmatprep.subr.bf16.mxu0 0
          %2255 = vmatpush2.bf16.msra.mxu0 0
          %2256 = vmatprep.subr.bf16.mxu0 0
          %2257 = vmatpush2.bf16.msra.mxu0 0
          %2258 = vmatprep.subr.bf16.mxu0 0
          %2259 = vmatpush2.bf16.msra.mxu0 0
          %2260 = vmatprep.subr.bf16.mxu0 0
          %2261 = vmatpush2.bf16.msra.mxu0 0
          %2262 = vmatprep.subr.bf16.mxu0 0
          %2263 = vmatpush2.bf16.msra.mxu0 0
          %2264 = vmatprep.subr.bf16.mxu0 0
          %2265 = vmatpush2.bf16.msra.mxu0 0
          %2266 = vmatprep.subr.bf16.mxu0 0
          %2267 = vmatpush2.bf16.msra.mxu0 0
          %2268 = vmatprep.subr.bf16.mxu0 0
          %2269 = vmatpush2.bf16.msra.mxu0 0
          %2270 = vmatprep.mubr.bf16.mxu0 0
          %2271 = vmatmul.mubr.bf16.gmra.mxu0 %v2163
          %v2272 = vpop.f32.mrf.mxu0
          %v2273 = vadd.f32 %v2188, %v2272
          %v2274 = vpop.f32.mrf.mxu0
          %v2275 = vpop.f32.mrf.mxu0
          %v2276 = vadd.f32 %v2188, %v2275
          %v2277 = vpop.f32.mrf.mxu0
          %2278 = vmatprep.mubr.bf16.mxu0 0
          %2279 = vmatmul.mubr.bf16.gmra.mxu0 %v2164
          %v2280 = vpop.f32.mrf.mxu0
          %v2281 = vadd.f32 %v2188, %v2280
          %v2282 = vpop.f32.mrf.mxu0
          %v2283 = vpop.f32.mrf.mxu0
          %v2284 = vadd.f32 %v2188, %v2283
          %v2285 = vpop.f32.mrf.mxu0
          %2286 = vmatprep.mubr.bf16.mxu0 0
          %2287 = vmatmul.mubr.bf16.gmra.mxu0 %v2165
          %v2288 = vpop.f32.mrf.mxu0
          %v2289 = vadd.f32 %v2188, %v2288
          %v2290 = vpop.f32.mrf.mxu0
          %v2291 = vpop.f32.mrf.mxu0
          %v2292 = vadd.f32 %v2188, %v2291
          %v2293 = vpop.f32.mrf.mxu0
          %2294 = vmatprep.mubr.bf16.mxu0 0
          %2295 = vmatmul.mubr.bf16.gmra.mxu0 %v2166
          %v2296 = vpop.f32.mrf.mxu0
          %v2297 = vadd.f32 %v2188, %v2296
          %v2298 = vpop.f32.mrf.mxu0
          %v2299 = vpop.f32.mrf.mxu0
          %v2300 = vadd.f32 %v2188, %v2299
          %v2301 = vpop.f32.mrf.mxu0
          %2302 = vdwg.mxu0
          %v2303 = vmax.f32 %v2273, 0.0
          %v2304 = vmax.f32 %v2276, 0.0
          %v2305 = vmax.f32 %v2281, 0.0
          %v2306 = vmax.f32 %v2284, 0.0
          %v2307 = vmax.f32 %v2289, 0.0
          %v2308 = vmax.f32 %v2292, 0.0
          %v2309 = vmax.f32 %v2297, 0.0
          %v2310 = vmax.f32 %v2300, 0.0
          %v2311 = vpack.c.bf16 %v2304, %v2303
          %v2312 = vpack.c.bf16 %v2306, %v2305
          %v2313 = vpack.c.bf16 %v2308, %v2307
          %v2314 = vpack.c.bf16 %v2310, %v2309
          %v2315 = vld [vmem:[#allocation9] sm:$0xf]
          %v2316 = vld [vmem:[#allocation9 + $0x4] sm:$0xf]
          %v2317 = vld [vmem:[#allocation9 + $0x8] sm:$0xf]
          %v2318 = vld [vmem:[#allocation9 + $0xc] sm:$0xf]
          %v2319 = vld [vmem:[#allocation9 + $0x10] sm:$0xf]
          %v2320 = vld [vmem:[#allocation9 + $0x14] sm:$0xf]
          %v2321 = vld [vmem:[#allocation9 + $0x18] sm:$0xf]
          %v2322 = vld [vmem:[#allocation9 + $0x1c] sm:$0xf]
          %v2323 = vld [vmem:[#allocation9 + $0x20] sm:$0xf]
          %v2324 = vld [vmem:[#allocation9 + $0x24] sm:$0xf]
          %v2325 = vld [vmem:[#allocation9 + $0x28] sm:$0xf]
          %v2326 = vld [vmem:[#allocation9 + $0x2c] sm:$0xf]
          %v2327 = vld [vmem:[#allocation9 + $0x30] sm:$0xf]
          %v2328 = vld [vmem:[#allocation9 + $0x34] sm:$0xf]
          %v2329 = vld [vmem:[#allocation9 + $0x38] sm:$0xf]
          %v2330 = vld [vmem:[#allocation9 + $0x3c] sm:$0xf]
          %v2331 = vld [vmem:[%s8] sm:$0x1]
          %v2333 = vlaneseq
          %v2334 = vshrl.u32 %v2333, 7
          %v2335 = vsub.s32 0, %v2334
          %v2336 = vrot.slane %v2331, %v2335
          %v2354 = vunpack.c.l.b16 %v2315
          %v2355 = vunpack.c.l.b16 %v2316
          %v2356 = vunpack.c.l.b16 %v2317
          %v2357 = vunpack.c.l.b16 %v2318
          %v2358 = vunpack.c.l.b16 %v2319
          %v2359 = vunpack.c.l.b16 %v2320
          %v2360 = vunpack.c.l.b16 %v2321
          %v2361 = vunpack.c.l.b16 %v2322
          %v2362 = vunpack.c.l.b16 %v2323
          %v2363 = vunpack.c.l.b16 %v2324
          %v2364 = vunpack.c.l.b16 %v2325
          %v2365 = vunpack.c.l.b16 %v2326
          %v2366 = vunpack.c.l.b16 %v2327
          %v2367 = vunpack.c.l.b16 %v2328
          %v2368 = vunpack.c.l.b16 %v2329
          %v2369 = vunpack.c.l.b16 %v2330
          %v2370 = vpack.c.b16 %v2355, %v2354
          %v2371 = vpack.c.b16 %v2357, %v2356
          %v2372 = vpack.c.b16 %v2359, %v2358
          %v2373 = vpack.c.b16 %v2361, %v2360
          %v2374 = vpack.c.b16 %v2363, %v2362
          %v2375 = vpack.c.b16 %v2365, %v2364
          %v2376 = vpack.c.b16 %v2367, %v2366
          %v2377 = vpack.c.b16 %v2369, %v2368
          %2386 = vmatprep.subr.bf16.mxu0 0
          %2387 = vmatpush1.bf16.msra.mxu0 %v2377
          %2388 = vmatprep.subr.bf16.mxu0 0
          %2389 = vmatpush1.bf16.msra.mxu0 %v2376
          %2390 = vmatprep.subr.bf16.mxu0 0
          %2391 = vmatpush1.bf16.msra.mxu0 %v2375
          %2392 = vmatprep.subr.bf16.mxu0 0
          %2393 = vmatpush1.bf16.msra.mxu0 %v2374
          %2394 = vmatprep.subr.bf16.mxu0 0
          %2395 = vmatpush1.bf16.msra.mxu0 %v2373
          %2396 = vmatprep.subr.bf16.mxu0 0
          %2397 = vmatpush1.bf16.msra.mxu0 %v2372
          %2398 = vmatprep.subr.bf16.mxu0 0
          %2399 = vmatpush1.bf16.msra.mxu0 %v2371
          %2400 = vmatprep.subr.bf16.mxu0 0
          %2401 = vmatpush1.bf16.msra.mxu0 %v2370
          %2402 = vmatprep.subr.bf16.mxu0 0
          %2403 = vmatpush2.bf16.msra.mxu0 0
          %2404 = vmatprep.subr.bf16.mxu0 0
          %2405 = vmatpush2.bf16.msra.mxu0 0
          %2406 = vmatprep.subr.bf16.mxu0 0
          %2407 = vmatpush2.bf16.msra.mxu0 0
          %2408 = vmatprep.subr.bf16.mxu0 0
          %2409 = vmatpush2.bf16.msra.mxu0 0
          %2410 = vmatprep.subr.bf16.mxu0 0
          %2411 = vmatpush2.bf16.msra.mxu0 0
          %2412 = vmatprep.subr.bf16.mxu0 0
          %2413 = vmatpush2.bf16.msra.mxu0 0
          %2414 = vmatprep.subr.bf16.mxu0 0
          %2415 = vmatpush2.bf16.msra.mxu0 0
          %2416 = vmatprep.subr.bf16.mxu0 0
          %2417 = vmatpush2.bf16.msra.mxu0 0
          %2418 = vmatprep.mubr.bf16.mxu0 0
          %2419 = vmatmul.mubr.bf16.gmra.mxu0 %v2311
          %v2420 = vpop.f32.mrf.mxu0
          %v2421 = vadd.f32 %v2336, %v2420
          %v2422 = vpop.f32.mrf.mxu0
          %v2423 = vpop.f32.mrf.mxu0
          %v2424 = vadd.f32 %v2336, %v2423
          %v2425 = vpop.f32.mrf.mxu0
          %2426 = vmatprep.mubr.bf16.mxu0 0
          %2427 = vmatmul.mubr.bf16.gmra.mxu0 %v2312
          %v2428 = vpop.f32.mrf.mxu0
          %v2429 = vadd.f32 %v2336, %v2428
          %v2430 = vpop.f32.mrf.mxu0
          %v2431 = vpop.f32.mrf.mxu0
          %v2432 = vadd.f32 %v2336, %v2431
          %v2433 = vpop.f32.mrf.mxu0
          %2434 = vmatprep.mubr.bf16.mxu0 0
          %2435 = vmatmul.mubr.bf16.gmra.mxu0 %v2313
          %v2436 = vpop.f32.mrf.mxu0
          %v2437 = vadd.f32 %v2336, %v2436
          %v2438 = vpop.f32.mrf.mxu0
          %v2439 = vpop.f32.mrf.mxu0
          %v2440 = vadd.f32 %v2336, %v2439
          %v2441 = vpop.f32.mrf.mxu0
          %2442 = vmatprep.mubr.bf16.mxu0 0
          %2443 = vmatmul.mubr.bf16.gmra.mxu0 %v2314
          %v2444 = vpop.f32.mrf.mxu0
          %v2445 = vadd.f32 %v2336, %v2444
          %v2446 = vpop.f32.mrf.mxu0
          %v2447 = vpop.f32.mrf.mxu0
          %v2448 = vadd.f32 %v2336, %v2447
          %v2449 = vpop.f32.mrf.mxu0
          %2450 = vdwg.mxu0
          %2451 = vst [vmem:[%s9] sm:$0xff] %v2421
          %2452 = vst [vmem:[%s9 + $0x8] sm:$0xff] %v2424
          %2453 = vst [vmem:[%s9 + $0x10] sm:$0xff] %v2429
          %2454 = vst [vmem:[%s9 + $0x18] sm:$0xff] %v2432
          %2455 = vst [vmem:[%s9 + $0x20] sm:$0xff] %v2437
          %2456 = vst [vmem:[%s9 + $0x28] sm:$0xff] %v2440
          %2457 = vst [vmem:[%s9 + $0x30] sm:$0xff] %v2445
          %2458 = vst [vmem:[%s9 + $0x38] sm:$0xff] %v2448
        $region80: #{lstm_op_forward.1} parent=55 // pred_fallthru
          _
        // Predicated region
        $region81: #{lstm_op_forward.1} parent=55 // pred_check
          %p2459 = pneg %p244
        $region82: #{lstm_op_forward.1} parent=55 // pred_check_branch
          %2461 = sbr.rel (%p2459) target = $region84
        $region83: #{lstm_op_forward.1} parent=55 // pred_region
          _
        $region84: #{lstm_op_forward.1} parent=55 // pred_fallthru
          _
        // Predicated region
        $region85: #{lstm_op_forward.1} parent=55 // pred_check
          %p2462 = pneg %p244
        $region86: #{lstm_op_forward.1} parent=55 // pred_check_branch
          %2464 = sbr.rel (%p2462) target = $region88
        $region87: #{lstm_op_forward.1} parent=55 // pred_region
          _
        $region88: #{lstm_op_forward.1} parent=55 // pred_fallthru
          _
      $region56: #{lstm_op_forward.1} parent=5 // pred_fallthru
        _
      %p2465 = scmp.le.s32.totalorder 2, %s22
      // Predicated region
      $region89: #{lstm_op_forward.1} parent=5 // pred_check
        %p2466 = pneg %p2465
      $region90: #{lstm_op_forward.1} parent=5 // pred_check_branch
        %2468 = sbr.rel (%p2466) target = $region92
      $region91: #{lstm_op_forward.1} parent=5 // pred_region
        %s2469 = ssub.s32 %s22, 2
      $region92: #{lstm_op_forward.1} parent=5 // pred_fallthru
        _
    $region6: #{lstm_op_forward.1} parent=1 // loop_footer
      %s26 = sadd.s32 1, %s22
    $region7: #{lstm_op_forward.1} parent=1 // loop_footer_branch
      %21 = sbr.rel target = $region3
    $region8: #{lstm_op_forward.1} parent=1 // loop_exit
      _
    %2470 = vsyncpa [#allocation5], 1
    %s2471 = scalar_lea.sflag [#allocation5], 1
    %2472 = vsyncpa %s2471, 1
    %2473 = vsyncpa [#allocation7], 1
    %s2474 = scalar_lea.sflag [#allocation7], 1
    %2475 = vsyncpa %s2474, 1
    %2476 = vsyncpa [#allocation10], 1

</llo_original>
